<compile_context>
chip_gen: v7x
topology: tpu7x:2x2x1
jax: 0.10.0
libtpu: 0.0.40
codegen_flags: <defaults>
</compile_context>

<pallas_src>
import functools

import jax
import jax.numpy as jnp
import numpy as np
from jax.experimental import pallas as pl
from jax.experimental.pallas import tpu as pltpu


def _scale_body(vox_ref, valid_ref, w_ref, b_ref, out_ref):
    """One BEV scale for the current batch element.

    vox_ref   : (1, S, C*Y, ZX)  bf16 camera voxel features
    valid_ref : (1, S, Y,   ZX)  bf16 compact per-voxel validity (no C bcast in HBM)
    w_ref     : (Cout, C*Y)      f32 1x1-conv weight (C2aLayer channel map)
    b_ref     : (Cout, 1)        f32 1x1-conv bias
    out_ref   : (1, Cout, ZX)    f32 BEV output for this batch element
    """
    S = valid_ref.shape[1]
    Y = valid_ref.shape[2]
    CY = vox_ref.shape[2]
    C = CY // Y

    valid = valid_ref[0].astype(jnp.float32)                 # (S, Y, ZX)
    msum = jnp.sum(valid, axis=0)                             # cameras per voxel
    # relu(msum - 1) + 1 is a small positive integer; the EUP approx reciprocal
    # is exact for the power-of-two denominators that occur for S <= 2.
    inv = pl.reciprocal(jnp.maximum(msum - 1.0, 0.0) + 1.0, approx=True)

    bev = None
    for s in range(S):                                        # S is static & small
        m = valid[s] * inv                                    # norm folded into mask
        m_full = jnp.concatenate([m] * C, axis=0)             # (C*Y, ZX), VMEM only
        term = vox_ref[0, s].astype(jnp.float32) * m_full
        bev = term if bev is None else bev + term

    y = jnp.dot(w_ref[...], bev, preferred_element_type=jnp.float32) + b_ref[...]
    out_ref[0] = y * jax.nn.sigmoid(y)                        # SiLU


def _fused_perspective_kernel(*refs, n_scales):
    ins, outs = refs[: 4 * n_scales], refs[4 * n_scales:]
    for k in range(n_scales):
        _scale_body(*ins[4 * k: 4 * k + 4], outs[k])


def perspective_trans_fused(voxes, valids, weights, biases, *, B, S, Y, zx_sizes):
    """All scales of PerspectiveTrans.forward (post gridsample_Pix2Vox) fused
    into ONE pallas_call.

    voxes[k]   : (B*S, C_k*Y, Z_k*X_k)  voxel features (any float dtype)
    valids[k]  : (B*S, 1, Y, Z_k*X_k)   per-voxel validity (0/1), compact over C
    weights[k] : (C_k, C_k*Y)           1x1 conv weight (C2aLayer channel map)
    biases[k]  : (C_k,)                 1x1 conv bias
    zx_sizes   : [(Z_k, X_k)] per scale
    returns    : [(B, C_k, Z_k, X_k) float32] per scale
    """
    n = len(voxes)
    in_arrays, in_specs, out_shapes, out_specs = [], [], [], []
    flops = transcendentals = bytes_accessed = 0
    block_bytes = 0

    for k in range(n):
        C = weights[k].shape[0]
        CY = C * Y
        Z, X = zx_sizes[k]
        ZX = Z * X

        # bf16 halves the dominant vox DMA; mask values (0/1) are exact in bf16.
        vox = voxes[k].reshape(B, S, CY, ZX).astype(jnp.bfloat16)
        valid = valids[k].reshape(B, S, Y, ZX).astype(jnp.bfloat16)
        w = weights[k].astype(jnp.float32)
        b2 = biases[k].reshape(C, 1).astype(jnp.float32)
        in_arrays += [vox, valid, w, b2]
        in_specs += [
            pl.BlockSpec((1, S, CY, ZX), lambda b: (b, 0, 0, 0)),
            pl.BlockSpec((1, S, Y, ZX), lambda b: (b, 0, 0, 0)),
            pl.BlockSpec((C, CY), lambda b: (0, 0)),
            pl.BlockSpec((C, 1), lambda b: (0, 0)),
        ]
        out_shapes.append(jax.ShapeDtypeStruct((B, C, ZX), jnp.float32))
        out_specs.append(pl.BlockSpec((1, C, ZX), lambda b: (b, 0, 0)))

        flops += 2 * B * S * CY * ZX + 2 * B * S * Y * ZX       # mask apply + sum
        flops += 2 * B * C * CY * ZX + 4 * B * C * ZX            # matmul + bias/silu
        transcendentals += B * (C + Y) * ZX                      # sigmoid + recip
        bytes_accessed += (2 * B * S * (CY + Y) * ZX             # bf16 inputs
                           + 4 * (C * CY + C)                    # f32 params
                           + 4 * B * C * ZX)                     # f32 outputs

        block_bytes += 2 * S * CY * ZX          # vox block, bf16
        block_bytes += 2 * S * 8 * ZX           # valid block, bf16 (Y padded to 8)
        block_bytes += 4 * (C * CY + C)         # weight + bias, f32
        block_bytes += 4 * C * ZX               # output block, f32

    # Double-buffered blocks + in-kernel f32 temporaries with headroom, capped
    # well under v7x's 64 MiB physical VMEM (demo sizes land at the 16 MiB floor).
    vmem_limit = int(min(64 << 20, max(16 << 20, 8 * block_bytes)))

    outs = pl.pallas_call(
        functools.partial(_fused_perspective_kernel, n_scales=n),
        out_shape=tuple(out_shapes),
        grid_spec=pltpu.PrefetchScalarGridSpec(
            num_scalar_prefetch=0,
            grid=(B,),                       # >=2 parallel steps for B>=2 (v7x)
            in_specs=in_specs,
            out_specs=tuple(out_specs),
        ),
        compiler_params=pltpu.CompilerParams(
            dimension_semantics=("parallel",),
            vmem_limit_bytes=vmem_limit,
        ),
        cost_estimate=pl.CostEstimate(
            flops=int(flops),
            transcendentals=int(transcendentals),
            bytes_accessed=int(bytes_accessed),
        ),
    )(*in_arrays)

    return [outs[k].reshape(B, weights[k].shape[0], zx_sizes[k][0], zx_sizes[k][1])
            for k in range(n)]


class PerspectiveTrans:
    """JAX/Pallas port of yoloxocc PerspectiveTrans (gridsample mode)."""

    def __init__(self,
                 in_features=("fpn3", "fpn4", "fpn5"),
                 in_channels=(8, 16, 32),
                 out_features=("trans3", "trans4", "trans5"),
                 vox_xyz_size=(32, 4, 32),
                 key=jax.random.PRNGKey(0)):
        assert len(in_features) == len(in_channels) == 3
        self.in_features = in_features
        self.in_channels = list(in_channels)
        self.out_features = out_features
        self.vox_xyz_size = list(vox_xyz_size)   # (X, Y, Z)

        X, Y, Z = vox_xyz_size
        self.scale_zx = [(Z // 2, X // 2), (Z // 4, X // 4), (Z // 8, X // 8)]

        # deterministic parameter init for the per-scale channel projections
        self.weights, self.biases = [], []
        for c in self.in_channels:
            key, wk = jax.random.split(key)
            cy = c * Y
            w = jax.random.normal(wk, (c, cy), jnp.float32) / jnp.sqrt(float(cy))
            b = jnp.zeros((c,), jnp.float32)
            self.weights.append(w)
            self.biases.append(b)

    def __call__(self, inputs):
        B, S = inputs["B"], inputs["S"]
        _, Y, _ = self.vox_xyz_size
        # inputs carry the gridsample_Pix2Vox results per scale:
        #   vox_sK   : (B*S, C*Y, Z_K*X_K)
        #   valid_sK : (B*S, 1, Y, Z_K*X_K)
        voxes = [inputs[f"vox_{sfx}"] for sfx in ("s2", "s4", "s8")]
        valids = [inputs[f"valid_{sfx}"] for sfx in ("s2", "s4", "s8")]
        bevs = perspective_trans_fused(
            voxes, valids, self.weights, self.biases,
            B=B, S=S, Y=Y, zx_sizes=self.scale_zx)
        outputs = dict(inputs)
        for name, bev in zip(self.out_features, bevs):
            outputs[name] = bev
        return outputs


def _reference(vox, valid, weight, bias, *, B, S, C, Y, Z, X):
    """Pure-numpy replica of the torch forward for one scale."""
    vox = np.asarray(vox, np.float32)
    valid = np.asarray(valid, np.float32)
    W = np.asarray(weight, np.float32)
    b = np.asarray(bias, np.float32)
    BS, CY, ZX = B * S, C * Y, Z * X
    mask = valid.reshape(BS, 1, Y, ZX)
    mask = np.repeat(mask, C, axis=1).reshape(BS, CY, ZX)
    voxm = vox.reshape(BS, CY, ZX) * mask
    bev = voxm.reshape(B, S, CY, ZX).sum(axis=1)
    mbev = mask.reshape(B, S, CY, ZX).sum(axis=1)
    mbev = np.maximum(mbev - 1.0, 0.0) + 1.0
    bev = (bev / mbev).reshape(B, CY, Z, X)
    y = np.einsum("oc,bchw->bohw", W, bev) + b[None, :, None, None]
    return y * (1.0 / (1.0 + np.exp(-y)))


if __name__ == "__main__":
    B, S = 2, 2                       # batch, cameras  (BS = 4)
    in_channels = (8, 16, 32)
    vox_xyz_size = (32, 4, 32)        # (X, Y, Z)
    X, Y, Z = vox_xyz_size

    model = PerspectiveTrans(in_channels=in_channels,
                             vox_xyz_size=vox_xyz_size,
                             key=jax.random.PRNGKey(0))

    key = jax.random.PRNGKey(0)
    inputs = {"B": B, "S": S}
    shapes = {}
    for idx, suffix in enumerate(("s2", "s4", "s8")):
        C = in_channels[idx]
        Zk, Xk = model.scale_zx[idx]
        ZX = Zk * Xk
        key, kv, km = jax.random.split(key, 3)
        # gridsample_Pix2Vox would produce these; ship them in bf16.
        vox = jax.random.normal(kv, (B * S, C * Y, ZX), jnp.float32).astype(jnp.bfloat16)
        valid = (jax.random.uniform(km, (B * S, 1, Y, ZX)) > 0.3).astype(jnp.bfloat16)
        inputs[f"vox_{suffix}"] = vox
        inputs[f"valid_{suffix}"] = valid
        shapes[suffix] = (C, Y, Zk, Xk)

    outputs = model(inputs)
    for name in model.out_features:
        jax.block_until_ready(outputs[name])

    # correctness check against a pure-numpy replica of the torch semantics,
    # fed the exact same bf16-quantised inputs the kernel sees
    for idx, (suffix, out_name) in enumerate(zip(("s2", "s4", "s8"),
                                                 model.out_features)):
        C, Yk, Zk, Xk = shapes[suffix]
        vox_f32 = np.asarray(inputs[f"vox_{suffix}"].astype(jnp.float32))
        valid_f32 = np.asarray(inputs[f"valid_{suffix}"].astype(jnp.float32))
        ref = _reference(vox_f32, valid_f32,
                         np.asarray(model.weights[idx]),
                         np.asarray(model.biases[idx]),
                         B=B, S=S, C=C, Y=Yk, Z=Zk, X=Xk)
        got = np.asarray(outputs[out_name])
        assert got.shape == (B, C, Zk, Xk), (got.shape, (B, C, Zk, Xk))
        np.testing.assert_allclose(got, ref, rtol=2e-3, atol=2e-3)

    print("KERNEL_OK")
</pallas_src>

<mosaic_0001>
module attributes {stable_mosaic.version = 11 : i64} {
  func.func @_fused_perspective_kernel(%arg0: i32, %arg1: memref<1x2x32x256xbf16, #tpu.memory_space<vmem>>, %arg2: memref<1x2x4x256xbf16, #tpu.memory_space<vmem>>, %arg3: memref<8x32xf32, #tpu.memory_space<vmem>>, %arg4: memref<8x1xf32, #tpu.memory_space<vmem>>, %arg5: memref<1x2x64x64xbf16, #tpu.memory_space<vmem>>, %arg6: memref<1x2x4x64xbf16, #tpu.memory_space<vmem>>, %arg7: memref<16x64xf32, #tpu.memory_space<vmem>>, %arg8: memref<16x1xf32, #tpu.memory_space<vmem>>, %arg9: memref<1x2x128x16xbf16, #tpu.memory_space<vmem>>, %arg10: memref<1x2x4x16xbf16, #tpu.memory_space<vmem>>, %arg11: memref<32x128xf32, #tpu.memory_space<vmem>>, %arg12: memref<32x1xf32, #tpu.memory_space<vmem>>, %arg13: memref<1x8x256xf32, #tpu.memory_space<vmem>>, %arg14: memref<1x16x64xf32, #tpu.memory_space<vmem>>, %arg15: memref<1x32x16xf32, #tpu.memory_space<vmem>>) attributes {dimension_semantics = [#tpu.dimension_semantics<parallel>], iteration_bounds = array<i64: 2>, scalar_prefetch = 0 : i64, scratch_operands = 0 : i64, tpu.core_type = #tpu.core_type<tc>, window_params = [{transform_indices = @transform_0, window_bounds = array<i64: 1, 2, 32, 256>}, {transform_indices = @transform_1, window_bounds = array<i64: 1, 2, 4, 256>}, {pipeline_mode = #tpu.pipeline_mode<synchronous>, transform_indices = @transform_2, window_bounds = array<i64: 8, 32>}, {pipeline_mode = #tpu.pipeline_mode<synchronous>, transform_indices = @transform_3, window_bounds = array<i64: 8, 1>}, {transform_indices = @transform_4, window_bounds = array<i64: 1, 2, 64, 64>}, {transform_indices = @transform_5, window_bounds = array<i64: 1, 2, 4, 64>}, {pipeline_mode = #tpu.pipeline_mode<synchronous>, transform_indices = @transform_6, window_bounds = array<i64: 16, 64>}, {pipeline_mode = #tpu.pipeline_mode<synchronous>, transform_indices = @transform_7, window_bounds = array<i64: 16, 1>}, {transform_indices = @transform_8, window_bounds = array<i64: 1, 2, 128, 16>}, {transform_indices = @transform_9, window_bounds = array<i64: 1, 2, 4, 16>}, {pipeline_mode = #tpu.pipeline_mode<synchronous>, transform_indices = @transform_10, window_bounds = array<i64: 32, 128>}, {pipeline_mode = #tpu.pipeline_mode<synchronous>, transform_indices = @transform_11, window_bounds = array<i64: 32, 1>}, {transform_indices = @transform_12, window_bounds = array<i64: 1, 8, 256>}, {transform_indices = @transform_13, window_bounds = array<i64: 1, 16, 64>}, {transform_indices = @transform_14, window_bounds = array<i64: 1, 32, 16>}]} {
    %c0 = arith.constant 0 : index
    %c0_0 = arith.constant 0 : index
    %c0_1 = arith.constant 0 : index
    %c0_2 = arith.constant 0 : index
    %0 = vector.load %arg2[%c0, %c0_0, %c0_1, %c0_2] : memref<1x2x4x256xbf16, #tpu.memory_space<vmem>>, vector<1x2x4x256xbf16>
    %1 = vector.shape_cast %0 : vector<1x2x4x256xbf16> to vector<2x4x256xbf16>
    %2 = arith.extf %1 : vector<2x4x256xbf16> to vector<2x4x256xf32>
    %cst = arith.constant dense<0.000000e+00> : vector<4x256xf32>
    %3 = vector.multi_reduction <add>, %2, %cst [0] : vector<2x4x256xf32> to vector<4x256xf32>
    %cst_3 = arith.constant 1.000000e+00 : f32
    %4 = vector.broadcast %cst_3 : f32 to vector<4x256xf32>
    %5 = arith.subf %3, %4 : vector<4x256xf32>
    %cst_4 = arith.constant 0.000000e+00 : f32
    %6 = vector.broadcast %cst_4 : f32 to vector<4x256xf32>
    %7 = arith.maximumf %5, %6 : vector<4x256xf32>
    %cst_5 = arith.constant 1.000000e+00 : f32
    %8 = vector.broadcast %cst_5 : f32 to vector<4x256xf32>
    %9 = arith.addf %7, %8 : vector<4x256xf32>
    %10 = tpu.reciprocal %9 {approx = true} : vector<4x256xf32> -> vector<4x256xf32>
    %11 = vector.extract_strided_slice %2 {offsets = [0, 0, 0], sizes = [1, 4, 256], strides = [1, 1, 1]} : vector<2x4x256xf32> to vector<1x4x256xf32>
    %12 = vector.shape_cast %11 : vector<1x4x256xf32> to vector<4x256xf32>
    %13 = arith.mulf %12, %10 : vector<4x256xf32>
    %14 = tpu.concatenate %13, %13, %13, %13, %13, %13, %13, %13 in 0 : vector<4x256xf32>, vector<4x256xf32>, vector<4x256xf32>, vector<4x256xf32>, vector<4x256xf32>, vector<4x256xf32>, vector<4x256xf32>, vector<4x256xf32> -> vector<32x256xf32>
    %c0_6 = arith.constant 0 : index
    %c0_7 = arith.constant 0 : index
    %c0_8 = arith.constant 0 : index
    %c0_9 = arith.constant 0 : index
    %15 = vector.load %arg1[%c0_6, %c0_7, %c0_8, %c0_9] : memref<1x2x32x256xbf16, #tpu.memory_space<vmem>>, vector<1x1x32x256xbf16>
    %16 = vector.shape_cast %15 : vector<1x1x32x256xbf16> to vector<32x256xbf16>
    %17 = arith.extf %16 : vector<32x256xbf16> to vector<32x256xf32>
    %18 = arith.mulf %17, %14 : vector<32x256xf32>
    %19 = vector.extract_strided_slice %2 {offsets = [1, 0, 0], sizes = [1, 4, 256], strides = [1, 1, 1]} : vector<2x4x256xf32> to vector<1x4x256xf32>
    %20 = vector.shape_cast %19 : vector<1x4x256xf32> to vector<4x256xf32>
    %21 = arith.mulf %20, %10 : vector<4x256xf32>
    %22 = tpu.concatenate %21, %21, %21, %21, %21, %21, %21, %21 in 0 : vector<4x256xf32>, vector<4x256xf32>, vector<4x256xf32>, vector<4x256xf32>, vector<4x256xf32>, vector<4x256xf32>, vector<4x256xf32>, vector<4x256xf32> -> vector<32x256xf32>
    %c0_10 = arith.constant 0 : index
    %c1 = arith.constant 1 : index
    %c0_11 = arith.constant 0 : index
    %c0_12 = arith.constant 0 : index
    %23 = vector.load %arg1[%c0_10, %c1, %c0_11, %c0_12] : memref<1x2x32x256xbf16, #tpu.memory_space<vmem>>, vector<1x1x32x256xbf16>
    %24 = vector.shape_cast %23 : vector<1x1x32x256xbf16> to vector<32x256xbf16>
    %25 = arith.extf %24 : vector<32x256xbf16> to vector<32x256xf32>
    %26 = arith.mulf %25, %22 : vector<32x256xf32>
    %27 = arith.addf %18, %26 : vector<32x256xf32>
    %c0_13 = arith.constant 0 : index
    %c0_14 = arith.constant 0 : index
    %28 = vector.load %arg3[%c0_13, %c0_14] : memref<8x32xf32, #tpu.memory_space<vmem>>, vector<8x32xf32>
    %cst_15 = arith.constant dense<0.000000e+00> : vector<8x256xf32>
    %29 = tpu.matmul %28, %27, %cst_15 {dimension_numbers = #tpu.dot_dimension_numbers<[1], [0], [0], [1], [0, 0, 1, 1], [], []>} : vector<8x32xf32>, vector<32x256xf32>, vector<8x256xf32> -> vector<8x256xf32>
    %c0_16 = arith.constant 0 : index
    %c0_17 = arith.constant 0 : index
    %30 = vector.load %arg4[%c0_16, %c0_17] : memref<8x1xf32, #tpu.memory_space<vmem>>, vector<8x1xf32>
    %31 = vector.broadcast %30 : vector<8x1xf32> to vector<8x256xf32>
    %32 = arith.addf %29, %31 : vector<8x256xf32>
    %33 = arith.negf %32 : vector<8x256xf32>
    %34 = math.exp %33 : vector<8x256xf32>
    %cst_18 = arith.constant 1.000000e+00 : f32
    %35 = vector.broadcast %cst_18 : f32 to vector<8x256xf32>
    %36 = arith.addf %35, %34 : vector<8x256xf32>
    %37 = arith.divf %35, %36 : vector<8x256xf32>
    %38 = arith.mulf %32, %37 : vector<8x256xf32>
    %c0_19 = arith.constant 0 : index
    %c0_20 = arith.constant 0 : index
    %c0_21 = arith.constant 0 : index
    %39 = vector.load %arg13[%c0_19, %c0_20, %c0_21] : memref<1x8x256xf32, #tpu.memory_space<vmem>>, vector<1x8x256xf32>
    %40 = vector.shape_cast %39 : vector<1x8x256xf32> to vector<8x256xf32>
    %41 = vector.shape_cast %38 : vector<8x256xf32> to vector<1x8x256xf32>
    tpu.vector_store %arg13[%c0_19, %c0_20, %c0_21], %41 {strides = array<i32>} : memref<1x8x256xf32, #tpu.memory_space<vmem>>, vector<1x8x256xf32>,
    %c0_22 = arith.constant 0 : index
    %c0_23 = arith.constant 0 : index
    %c0_24 = arith.constant 0 : index
    %c0_25 = arith.constant 0 : index
    %42 = vector.load %arg6[%c0_22, %c0_23, %c0_24, %c0_25] : memref<1x2x4x64xbf16, #tpu.memory_space<vmem>>, vector<1x2x4x64xbf16>
    %43 = vector.shape_cast %42 : vector<1x2x4x64xbf16> to vector<2x4x64xbf16>
    %44 = arith.extf %43 : vector<2x4x64xbf16> to vector<2x4x64xf32>
    %cst_26 = arith.constant dense<0.000000e+00> : vector<4x64xf32>
    %45 = vector.multi_reduction <add>, %44, %cst_26 [0] : vector<2x4x64xf32> to vector<4x64xf32>
    %cst_27 = arith.constant 1.000000e+00 : f32
    %46 = vector.broadcast %cst_27 : f32 to vector<4x64xf32>
    %47 = arith.subf %45, %46 : vector<4x64xf32>
    %cst_28 = arith.constant 0.000000e+00 : f32
    %48 = vector.broadcast %cst_28 : f32 to vector<4x64xf32>
    %49 = arith.maximumf %47, %48 : vector<4x64xf32>
    %cst_29 = arith.constant 1.000000e+00 : f32
    %50 = vector.broadcast %cst_29 : f32 to vector<4x64xf32>
    %51 = arith.addf %49, %50 : vector<4x64xf32>
    %52 = tpu.reciprocal %51 {approx = true} : vector<4x64xf32> -> vector<4x64xf32>
    %53 = vector.extract_strided_slice %44 {offsets = [0, 0, 0], sizes = [1, 4, 64], strides = [1, 1, 1]} : vector<2x4x64xf32> to vector<1x4x64xf32>
    %54 = vector.shape_cast %53 : vector<1x4x64xf32> to vector<4x64xf32>
    %55 = arith.mulf %54, %52 : vector<4x64xf32>
    %56 = tpu.concatenate %55, %55, %55, %55, %55, %55, %55, %55, %55, %55, %55, %55, %55, %55, %55, %55 in 0 : vector<4x64xf32>, vector<4x64xf32>, vector<4x64xf32>, vector<4x64xf32>, vector<4x64xf32>, vector<4x64xf32>, vector<4x64xf32>, vector<4x64xf32>, vector<4x64xf32>, vector<4x64xf32>, vector<4x64xf32>, vector<4x64xf32>, vector<4x64xf32>, vector<4x64xf32>, vector<4x64xf32>, vector<4x64xf32> -> vector<64x64xf32>
    %c0_30 = arith.constant 0 : index
    %c0_31 = arith.constant 0 : index
    %c0_32 = arith.constant 0 : index
    %c0_33 = arith.constant 0 : index
    %57 = vector.load %arg5[%c0_30, %c0_31, %c0_32, %c0_33] : memref<1x2x64x64xbf16, #tpu.memory_space<vmem>>, vector<1x1x64x64xbf16>
    %58 = vector.shape_cast %57 : vector<1x1x64x64xbf16> to vector<64x64xbf16>
    %59 = arith.extf %58 : vector<64x64xbf16> to vector<64x64xf32>
    %60 = arith.mulf %59, %56 : vector<64x64xf32>
    %61 = vector.extract_strided_slice %44 {offsets = [1, 0, 0], sizes = [1, 4, 64], strides = [1, 1, 1]} : vector<2x4x64xf32> to vector<1x4x64xf32>
    %62 = vector.shape_cast %61 : vector<1x4x64xf32> to vector<4x64xf32>
    %63 = arith.mulf %62, %52 : vector<4x64xf32>
    %64 = tpu.concatenate %63, %63, %63, %63, %63, %63, %63, %63, %63, %63, %63, %63, %63, %63, %63, %63 in 0 : vector<4x64xf32>, vector<4x64xf32>, vector<4x64xf32>, vector<4x64xf32>, vector<4x64xf32>, vector<4x64xf32>, vector<4x64xf32>, vector<4x64xf32>, vector<4x64xf32>, vector<4x64xf32>, vector<4x64xf32>, vector<4x64xf32>, vector<4x64xf32>, vector<4x64xf32>, vector<4x64xf32>, vector<4x64xf32> -> vector<64x64xf32>
    %c0_34 = arith.constant 0 : index
    %c1_35 = arith.constant 1 : index
    %c0_36 = arith.constant 0 : index
    %c0_37 = arith.constant 0 : index
    %65 = vector.load %arg5[%c0_34, %c1_35, %c0_36, %c0_37] : memref<1x2x64x64xbf16, #tpu.memory_space<vmem>>, vector<1x1x64x64xbf16>
    %66 = vector.shape_cast %65 : vector<1x1x64x64xbf16> to vector<64x64xbf16>
    %67 = arith.extf %66 : vector<64x64xbf16> to vector<64x64xf32>
    %68 = arith.mulf %67, %64 : vector<64x64xf32>
    %69 = arith.addf %60, %68 : vector<64x64xf32>
    %c0_38 = arith.constant 0 : index
    %c0_39 = arith.constant 0 : index
    %70 = vector.load %arg7[%c0_38, %c0_39] : memref<16x64xf32, #tpu.memory_space<vmem>>, vector<16x64xf32>
    %cst_40 = arith.constant dense<0.000000e+00> : vector<16x64xf32>
    %71 = tpu.matmul %70, %69, %cst_40 {dimension_numbers = #tpu.dot_dimension_numbers<[1], [0], [0], [1], [0, 0, 1, 1], [], []>} : vector<16x64xf32>, vector<64x64xf32>, vector<16x64xf32> -> vector<16x64xf32>
    %c0_41 = arith.constant 0 : index
    %c0_42 = arith.constant 0 : index
    %72 = vector.load %arg8[%c0_41, %c0_42] : memref<16x1xf32, #tpu.memory_space<vmem>>, vector<16x1xf32>
    %73 = vector.broadcast %72 : vector<16x1xf32> to vector<16x64xf32>
    %74 = arith.addf %71, %73 : vector<16x64xf32>
    %75 = arith.negf %74 : vector<16x64xf32>
    %76 = math.exp %75 : vector<16x64xf32>
    %cst_43 = arith.constant 1.000000e+00 : f32
    %77 = vector.broadcast %cst_43 : f32 to vector<16x64xf32>
    %78 = arith.addf %77, %76 : vector<16x64xf32>
    %79 = arith.divf %77, %78 : vector<16x64xf32>
    %80 = arith.mulf %74, %79 : vector<16x64xf32>
    %c0_44 = arith.constant 0 : index
    %c0_45 = arith.constant 0 : index
    %c0_46 = arith.constant 0 : index
    %81 = vector.load %arg14[%c0_44, %c0_45, %c0_46] : memref<1x16x64xf32, #tpu.memory_space<vmem>>, vector<1x16x64xf32>
    %82 = vector.shape_cast %81 : vector<1x16x64xf32> to vector<16x64xf32>
    %83 = vector.shape_cast %80 : vector<16x64xf32> to vector<1x16x64xf32>
    tpu.vector_store %arg14[%c0_44, %c0_45, %c0_46], %83 {strides = array<i32>} : memref<1x16x64xf32, #tpu.memory_space<vmem>>, vector<1x16x64xf32>,
    %c0_47 = arith.constant 0 : index
    %c0_48 = arith.constant 0 : index
    %c0_49 = arith.constant 0 : index
    %c0_50 = arith.constant 0 : index
    %84 = vector.load %arg10[%c0_47, %c0_48, %c0_49, %c0_50] : memref<1x2x4x16xbf16, #tpu.memory_space<vmem>>, vector<1x2x4x16xbf16>
    %85 = vector.shape_cast %84 : vector<1x2x4x16xbf16> to vector<2x4x16xbf16>
    %86 = arith.extf %85 : vector<2x4x16xbf16> to vector<2x4x16xf32>
    %cst_51 = arith.constant dense<0.000000e+00> : vector<4x16xf32>
    %87 = vector.multi_reduction <add>, %86, %cst_51 [0] : vector<2x4x16xf32> to vector<4x16xf32>
    %cst_52 = arith.constant 1.000000e+00 : f32
    %88 = vector.broadcast %cst_52 : f32 to vector<4x16xf32>
    %89 = arith.subf %87, %88 : vector<4x16xf32>
    %cst_53 = arith.constant 0.000000e+00 : f32
    %90 = vector.broadcast %cst_53 : f32 to vector<4x16xf32>
    %91 = arith.maximumf %89, %90 : vector<4x16xf32>
    %cst_54 = arith.constant 1.000000e+00 : f32
    %92 = vector.broadcast %cst_54 : f32 to vector<4x16xf32>
    %93 = arith.addf %91, %92 : vector<4x16xf32>
    %94 = tpu.reciprocal %93 {approx = true} : vector<4x16xf32> -> vector<4x16xf32>
    %95 = vector.extract_strided_slice %86 {offsets = [0, 0, 0], sizes = [1, 4, 16], strides = [1, 1, 1]} : vector<2x4x16xf32> to vector<1x4x16xf32>
    %96 = vector.shape_cast %95 : vector<1x4x16xf32> to vector<4x16xf32>
    %97 = arith.mulf %96, %94 : vector<4x16xf32>
    %98 = tpu.concatenate %97, %97, %97, %97, %97, %97, %97, %97, %97, %97, %97, %97, %97, %97, %97, %97 in 0 : vector<4x16xf32>, vector<4x16xf32>, vector<4x16xf32>, vector<4x16xf32>, vector<4x16xf32>, vector<4x16xf32>, vector<4x16xf32>, vector<4x16xf32>, vector<4x16xf32>, vector<4x16xf32>, vector<4x16xf32>, vector<4x16xf32>, vector<4x16xf32>, vector<4x16xf32>, vector<4x16xf32>, vector<4x16xf32> -> vector<64x16xf32>
    %99 = tpu.concatenate %97, %97, %97, %97, %97, %97, %97, %97, %97, %97, %97, %97, %97, %97, %97, %97 in 0 : vector<4x16xf32>, vector<4x16xf32>, vector<4x16xf32>, vector<4x16xf32>, vector<4x16xf32>, vector<4x16xf32>, vector<4x16xf32>, vector<4x16xf32>, vector<4x16xf32>, vector<4x16xf32>, vector<4x16xf32>, vector<4x16xf32>, vector<4x16xf32>, vector<4x16xf32>, vector<4x16xf32>, vector<4x16xf32> -> vector<64x16xf32>
    %100 = tpu.concatenate %98, %99 in 0 : vector<64x16xf32>, vector<64x16xf32> -> vector<128x16xf32>
    %c0_55 = arith.constant 0 : index
    %c0_56 = arith.constant 0 : index
    %c0_57 = arith.constant 0 : index
    %c0_58 = arith.constant 0 : index
    %101 = vector.load %arg9[%c0_55, %c0_56, %c0_57, %c0_58] : memref<1x2x128x16xbf16, #tpu.memory_space<vmem>>, vector<1x1x128x16xbf16>
    %102 = vector.shape_cast %101 : vector<1x1x128x16xbf16> to vector<128x16xbf16>
    %103 = arith.extf %102 : vector<128x16xbf16> to vector<128x16xf32>
    %104 = arith.mulf %103, %100 : vector<128x16xf32>
    %105 = vector.extract_strided_slice %86 {offsets = [1, 0, 0], sizes = [1, 4, 16], strides = [1, 1, 1]} : vector<2x4x16xf32> to vector<1x4x16xf32>
    %106 = vector.shape_cast %105 : vector<1x4x16xf32> to vector<4x16xf32>
    %107 = arith.mulf %106, %94 : vector<4x16xf32>
    %108 = tpu.concatenate %107, %107, %107, %107, %107, %107, %107, %107, %107, %107, %107, %107, %107, %107, %107, %107 in 0 : vector<4x16xf32>, vector<4x16xf32>, vector<4x16xf32>, vector<4x16xf32>, vector<4x16xf32>, vector<4x16xf32>, vector<4x16xf32>, vector<4x16xf32>, vector<4x16xf32>, vector<4x16xf32>, vector<4x16xf32>, vector<4x16xf32>, vector<4x16xf32>, vector<4x16xf32>, vector<4x16xf32>, vector<4x16xf32> -> vector<64x16xf32>
    %109 = tpu.concatenate %107, %107, %107, %107, %107, %107, %107, %107, %107, %107, %107, %107, %107, %107, %107, %107 in 0 : vector<4x16xf32>, vector<4x16xf32>, vector<4x16xf32>, vector<4x16xf32>, vector<4x16xf32>, vector<4x16xf32>, vector<4x16xf32>, vector<4x16xf32>, vector<4x16xf32>, vector<4x16xf32>, vector<4x16xf32>, vector<4x16xf32>, vector<4x16xf32>, vector<4x16xf32>, vector<4x16xf32>, vector<4x16xf32> -> vector<64x16xf32>
    %110 = tpu.concatenate %108, %109 in 0 : vector<64x16xf32>, vector<64x16xf32> -> vector<128x16xf32>
    %c0_59 = arith.constant 0 : index
    %c1_60 = arith.constant 1 : index
    %c0_61 = arith.constant 0 : index
    %c0_62 = arith.constant 0 : index
    %111 = vector.load %arg9[%c0_59, %c1_60, %c0_61, %c0_62] : memref<1x2x128x16xbf16, #tpu.memory_space<vmem>>, vector<1x1x128x16xbf16>
    %112 = vector.shape_cast %111 : vector<1x1x128x16xbf16> to vector<128x16xbf16>
    %113 = arith.extf %112 : vector<128x16xbf16> to vector<128x16xf32>
    %114 = arith.mulf %113, %110 : vector<128x16xf32>
    %115 = arith.addf %104, %114 : vector<128x16xf32>
    %c0_63 = arith.constant 0 : index
    %c0_64 = arith.constant 0 : index
    %116 = vector.load %arg11[%c0_63, %c0_64] : memref<32x128xf32, #tpu.memory_space<vmem>>, vector<32x128xf32>
    %cst_65 = arith.constant dense<0.000000e+00> : vector<32x16xf32>
    %117 = tpu.matmul %116, %115, %cst_65 {dimension_numbers = #tpu.dot_dimension_numbers<[1], [0], [0], [1], [0, 0, 1, 1], [], []>} : vector<32x128xf32>, vector<128x16xf32>, vector<32x16xf32> -> vector<32x16xf32>
    %c0_66 = arith.constant 0 : index
    %c0_67 = arith.constant 0 : index
    %118 = vector.load %arg12[%c0_66, %c0_67] : memref<32x1xf32, #tpu.memory_space<vmem>>, vector<32x1xf32>
    %119 = vector.broadcast %118 : vector<32x1xf32> to vector<32x16xf32>
    %120 = arith.addf %117, %119 : vector<32x16xf32>
    %121 = arith.negf %120 : vector<32x16xf32>
    %122 = math.exp %121 : vector<32x16xf32>
    %cst_68 = arith.constant 1.000000e+00 : f32
    %123 = vector.broadcast %cst_68 : f32 to vector<32x16xf32>
    %124 = arith.addf %123, %122 : vector<32x16xf32>
    %125 = arith.divf %123, %124 : vector<32x16xf32>
    %126 = arith.mulf %120, %125 : vector<32x16xf32>
    %c0_69 = arith.constant 0 : index
    %c0_70 = arith.constant 0 : index
    %c0_71 = arith.constant 0 : index
    %127 = vector.load %arg15[%c0_69, %c0_70, %c0_71] : memref<1x32x16xf32, #tpu.memory_space<vmem>>, vector<1x32x16xf32>
    %128 = vector.shape_cast %127 : vector<1x32x16xf32> to vector<32x16xf32>
    %129 = vector.shape_cast %126 : vector<32x16xf32> to vector<1x32x16xf32>
    tpu.vector_store %arg15[%c0_69, %c0_70, %c0_71], %129 {strides = array<i32>} : memref<1x32x16xf32, #tpu.memory_space<vmem>>, vector<1x32x16xf32>,
    return
  }
  func.func @transform_0(%arg0: i32) -> (i32, i32, i32, i32) {
    %c0_i32 = arith.constant 0 : i32
    %c0_i32_0 = arith.constant 0 : i32
    %c0_i32_1 = arith.constant 0 : i32
    %c0_i32_2 = arith.constant 0 : i32
    return %arg0, %c0_i32, %c0_i32_0, %c0_i32_1 : i32, i32, i32, i32
  }
  func.func @transform_1(%arg0: i32) -> (i32, i32, i32, i32) {
    %c0_i32 = arith.constant 0 : i32
    %c0_i32_0 = arith.constant 0 : i32
    %c0_i32_1 = arith.constant 0 : i32
    %c0_i32_2 = arith.constant 0 : i32
    return %arg0, %c0_i32, %c0_i32_0, %c0_i32_1 : i32, i32, i32, i32
  }
  func.func @transform_2(%arg0: i32) -> (i32, i32) {
    %c0_i32 = arith.constant 0 : i32
    %c0_i32_0 = arith.constant 0 : i32
    %c0_i32_1 = arith.constant 0 : i32
    return %c0_i32, %c0_i32_0 : i32, i32
  }
  func.func @transform_3(%arg0: i32) -> (i32, i32) {
    %c0_i32 = arith.constant 0 : i32
    %c0_i32_0 = arith.constant 0 : i32
    %c0_i32_1 = arith.constant 0 : i32
    return %c0_i32, %c0_i32_0 : i32, i32
  }
  func.func @transform_4(%arg0: i32) -> (i32, i32, i32, i32) {
    %c0_i32 = arith.constant 0 : i32
    %c0_i32_0 = arith.constant 0 : i32
    %c0_i32_1 = arith.constant 0 : i32
    %c0_i32_2 = arith.constant 0 : i32
    return %arg0, %c0_i32, %c0_i32_0, %c0_i32_1 : i32, i32, i32, i32
  }
  func.func @transform_5(%arg0: i32) -> (i32, i32, i32, i32) {
    %c0_i32 = arith.constant 0 : i32
    %c0_i32_0 = arith.constant 0 : i32
    %c0_i32_1 = arith.constant 0 : i32
    %c0_i32_2 = arith.constant 0 : i32
    return %arg0, %c0_i32, %c0_i32_0, %c0_i32_1 : i32, i32, i32, i32
  }
  func.func @transform_6(%arg0: i32) -> (i32, i32) {
    %c0_i32 = arith.constant 0 : i32
    %c0_i32_0 = arith.constant 0 : i32
    %c0_i32_1 = arith.constant 0 : i32
    return %c0_i32, %c0_i32_0 : i32, i32
  }
  func.func @transform_7(%arg0: i32) -> (i32, i32) {
    %c0_i32 = arith.constant 0 : i32
    %c0_i32_0 = arith.constant 0 : i32
    %c0_i32_1 = arith.constant 0 : i32
    return %c0_i32, %c0_i32_0 : i32, i32
  }
  func.func @transform_8(%arg0: i32) -> (i32, i32, i32, i32) {
    %c0_i32 = arith.constant 0 : i32
    %c0_i32_0 = arith.constant 0 : i32
    %c0_i32_1 = arith.constant 0 : i32
    %c0_i32_2 = arith.constant 0 : i32
    return %arg0, %c0_i32, %c0_i32_0, %c0_i32_1 : i32, i32, i32, i32
  }
  func.func @transform_9(%arg0: i32) -> (i32, i32, i32, i32) {
    %c0_i32 = arith.constant 0 : i32
    %c0_i32_0 = arith.constant 0 : i32
    %c0_i32_1 = arith.constant 0 : i32
    %c0_i32_2 = arith.constant 0 : i32
    return %arg0, %c0_i32, %c0_i32_0, %c0_i32_1 : i32, i32, i32, i32
  }
  func.func @transform_10(%arg0: i32) -> (i32, i32) {
    %c0_i32 = arith.constant 0 : i32
    %c0_i32_0 = arith.constant 0 : i32
    %c0_i32_1 = arith.constant 0 : i32
    return %c0_i32, %c0_i32_0 : i32, i32
  }
  func.func @transform_11(%arg0: i32) -> (i32, i32) {
    %c0_i32 = arith.constant 0 : i32
    %c0_i32_0 = arith.constant 0 : i32
    %c0_i32_1 = arith.constant 0 : i32
    return %c0_i32, %c0_i32_0 : i32, i32
  }
  func.func @transform_12(%arg0: i32) -> (i32, i32, i32) {
    %c0_i32 = arith.constant 0 : i32
    %c0_i32_0 = arith.constant 0 : i32
    %c0_i32_1 = arith.constant 0 : i32
    return %arg0, %c0_i32, %c0_i32_0 : i32, i32, i32
  }
  func.func @transform_13(%arg0: i32) -> (i32, i32, i32) {
    %c0_i32 = arith.constant 0 : i32
    %c0_i32_0 = arith.constant 0 : i32
    %c0_i32_1 = arith.constant 0 : i32
    return %arg0, %c0_i32, %c0_i32_0 : i32, i32, i32
  }
  func.func @transform_14(%arg0: i32) -> (i32, i32, i32) {
    %c0_i32 = arith.constant 0 : i32
    %c0_i32_0 = arith.constant 0 : i32
    %c0_i32_1 = arith.constant 0 : i32
    return %arg0, %c0_i32, %c0_i32_0 : i32, i32, i32
  }
}

</mosaic_0001>

<llo_original>
// kernel: tpu_custom_call.1
$region0: #{tpu_custom_call.1}
  #allocation0 [shape = 'u32[]', space=smem, size = 0x4, offset = 0x4, fixed_abs, tag = 'smem constant byte address 0x4 - core index']
  #allocation1 [shape = 'u32[144,128]{1,0:T(1,128)}', space=vmem, size = 0x12000, scoped, tag = 'internal scratch']
  %s0 = inlined_call_operand.vmem [shape: bf16[2,2,32,256], index: 0, kind: input, shape index: {}]
  %s1 = inlined_call_operand.vmem [shape: bf16[2,2,4,256], index: 1, kind: input, shape index: {}]
  %s2 = inlined_call_operand.hbm [shape: f32[8,32], index: 2, kind: input, shape index: {}]
  %s3 = inlined_call_operand.vmem [shape: f32[8,1], index: 3, kind: input, shape index: {}]
  %s4 = inlined_call_operand.vmem [shape: bf16[2,2,64,64], index: 4, kind: input, shape index: {}]
  %s5 = inlined_call_operand.vmem [shape: bf16[2,2,4,64], index: 5, kind: input, shape index: {}]
  %s6 = inlined_call_operand.vmem [shape: f32[16,64], index: 6, kind: input, shape index: {}]
  %s7 = inlined_call_operand.vmem [shape: f32[16,1], index: 7, kind: input, shape index: {}]
  %s8 = inlined_call_operand.vmem [shape: bf16[2,2,128,16], index: 8, kind: input, shape index: {}]
  %s9 = inlined_call_operand.vmem [shape: bf16[2,2,4,16], index: 9, kind: input, shape index: {}]
  %s10 = inlined_call_operand.vmem [shape: f32[32,128], index: 10, kind: input, shape index: {}]
  %s11 = inlined_call_operand.vmem [shape: f32[32,1], index: 11, kind: input, shape index: {}]
  %s12 = inlined_call_operand.hbm [shape: f32[2,8,256], index: 12, kind: output, shape index: {0}]
  %s13 = inlined_call_operand.hbm [shape: f32[2,16,64], index: 13, kind: output, shape index: {1}]
  %s14 = inlined_call_operand.vmem [shape: f32[2,32,16], index: 14, kind: output, shape index: {2}]
  %15 = xla_tuple %s12, %s13, %s14
  %s16 = sld [smem:[#allocation0]]
  $region101: #{tpu_custom_call.1} parent=0
    _
  %s18 = ssub.s32 1, %s16
  %s19 = scalar_select 0, %s18, %s16
  $region1: #{tpu_custom_call.1} parent=0
    #allocation2 [shape = 'u8[4096]{0}', space=vmem, size = 0x1000, scoped, tag = 'input window, operand 2, single buffered']
    #allocation3 [shape = 's32[2]{0}', space=sflag, size = 0x8, scoped, tag = 'scoped memory for tpu_custom_call.1']
    #allocation4 [shape = 's32[2]{0}', space=sflag, size = 0x8, scoped, tag = 'scoped memory for tpu_custom_call.1']
    #allocation5 [shape = 'u8[16384]{0}', space=vmem, size = 0x4000, scoped, tag = 'output window, operand 0']
    #allocation6 [shape = 'u8[16384]{0}', space=vmem, size = 0x4000, scoped, tag = 'output window, operand 1']
    #allocation7 [shape = 's32[2]{0}', space=sflag, size = 0x8, scoped, tag = 'scoped memory for tpu_custom_call.1']
    %20 = vsyncpa [#allocation3], 0
    %21 = vsyncpa [#allocation4], 0
    %s22 = scalar_lea.sflag [#allocation4], 1
    %23 = vsyncpa %s22, 0
    %24 = vsyncpa [#allocation7], 0
    %s25 = scalar_lea.sflag [#allocation7], 1
    %26 = vsyncpa %s25, 0
    loop: start=0, step=1, limit=4
    $region2: #{tpu_custom_call.1} parent=1 // loop_pre_header
      _
    $region3: #{tpu_custom_call.1} parent=1 // loop_header
      %s28 = sphi 0, %s32
      %p29 = scmp.ge.s32.totalorder %s28, 4
      %s38 = sphi 0, %s40
      %s41 = sphi 0, %s38
      %s42 = sphi 0, %s41
      %s58 = sphi 0, %s42
      %s64 = sphi 0, %s66
      %s67 = sphi 0, %s64
      %s68 = sphi 0, %s67
      %s84 = sphi 0, %s68
      %s88 = sphi 0, %s88
      %s90 = sphi 0, %s88
      %s91 = sphi 0, %s90
      %s105 = sphi 0, %s91
      %s109 = sphi 0, %s109
      %s111 = sphi 0, %s109
      %s112 = sphi 0, %s111
      %s126 = sphi 0, %s112
      %s132 = sphi 0, %s134
      %s135 = sphi 0, %s132
      %s136 = sphi 0, %s135
      %s152 = sphi 0, %s136
      %s158 = sphi 0, %s160
      %s161 = sphi 0, %s158
      %s162 = sphi 0, %s161
      %s178 = sphi 0, %s162
      %s182 = sphi 0, %s182
      %s184 = sphi 0, %s182
      %s185 = sphi 0, %s184
      %s199 = sphi 0, %s185
      %s203 = sphi 0, %s203
      %s205 = sphi 0, %s203
      %s206 = sphi 0, %s205
      %s220 = sphi 0, %s206
      %s226 = sphi 0, %s228
      %s229 = sphi 0, %s226
      %s230 = sphi 0, %s229
      %s246 = sphi 0, %s230
      %s252 = sphi 0, %s254
      %s255 = sphi 0, %s252
      %s256 = sphi 0, %s255
      %s272 = sphi 0, %s256
      %s276 = sphi 0, %s276
      %s278 = sphi 0, %s276
      %s279 = sphi 0, %s278
      %s293 = sphi 0, %s279
      %s297 = sphi 0, %s297
      %s299 = sphi 0, %s297
      %s300 = sphi 0, %s299
      %s314 = sphi 0, %s300
      %s320 = sphi 0, %s322
      %s323 = sphi 0, %s320
      %s324 = sphi 0, %s323
      %s340 = sphi 0, %s324
      %s346 = sphi 0, %s348
      %s349 = sphi 0, %s346
      %s350 = sphi 0, %s349
      %s366 = sphi 0, %s350
      %s372 = sphi 0, %s374
      %s375 = sphi 0, %s372
      %s376 = sphi 0, %s375
      %s392 = sphi 0, %s376
    $region4: #{tpu_custom_call.1} parent=1 // loop_header_branch
      %31 = sbr.rel (%p29) target = $region8
    $region5: #{tpu_custom_call.1} parent=1 // loop_body
      %s33 = ssub.s32 %s28, 1
      %s34 = ssub.s32 %s28, 2
      %s35 = sadd.s32 %s28, 1
      %s36 = ssub.s32 %s28, %s35
      %p37 = scmp.eq.s32.totalorder %s36, 0
      %s39 = sadd.s32 %s38, 1
      %s40 = scalar_select %p37, %s38, %s39
      %p43 = pneg %p37
      %p44 = scmp.eq.s32.totalorder %s28, 1
      %p45 = por %p43, %p44
      %p46 = scmp.ne.s32.totalorder %s38, %s41
      %p47 = scmp.eq.s32.totalorder %s28, 0
      %p48 = por %p46, %p47
      %p49 = scmp.ne.s32.totalorder %s38, %s41
      %p50 = scmp.eq.s32.totalorder %s33, 1
      %p51 = por %p49, %p50
      %p52 = scmp.ne.s32.totalorder %s41, %s42
      %p53 = scmp.eq.s32.totalorder %s33, 0
      %p54 = por %p52, %p53
      %p55 = scmp.ne.s32.totalorder %s41, %s42
      %p56 = scmp.eq.s32.totalorder %s34, 1
      %p57 = por %p55, %p56
      %p59 = scmp.ne.s32.totalorder %s42, %s58
      %p60 = scmp.eq.s32.totalorder %s34, 0
      %p61 = por %p59, %p60
      %s62 = ssub.s32 %s28, %s35
      %p63 = scmp.eq.s32.totalorder %s62, 0
      %s65 = sadd.s32 %s64, 1
      %s66 = scalar_select %p63, %s64, %s65
      %p69 = pneg %p63
      %p70 = scmp.eq.s32.totalorder %s28, 1
      %p71 = por %p69, %p70
      %p72 = scmp.ne.s32.totalorder %s64, %s67
      %p73 = scmp.eq.s32.totalorder %s28, 0
      %p74 = por %p72, %p73
      %p75 = scmp.ne.s32.totalorder %s64, %s67
      %p76 = scmp.eq.s32.totalorder %s33, 1
      %p77 = por %p75, %p76
      %p78 = scmp.ne.s32.totalorder %s67, %s68
      %p79 = scmp.eq.s32.totalorder %s33, 0
      %p80 = por %p78, %p79
      %p81 = scmp.ne.s32.totalorder %s67, %s68
      %p82 = scmp.eq.s32.totalorder %s34, 1
      %p83 = por %p81, %p82
      %p85 = scmp.ne.s32.totalorder %s68, %s84
      %p86 = scmp.eq.s32.totalorder %s34, 0
      %p87 = por %p85, %p86
      %s89 = sadd.s32 %s88, 1
      %p92 = scmp.eq.s32.totalorder %s28, 1
      %p93 = scmp.ne.s32.totalorder %s88, %s90
      %p94 = scmp.eq.s32.totalorder %s28, 0
      %p95 = por %p93, %p94
      %p96 = scmp.ne.s32.totalorder %s88, %s90
      %p97 = scmp.eq.s32.totalorder %s33, 1
      %p98 = por %p96, %p97
      %p99 = scmp.ne.s32.totalorder %s90, %s91
      %p100 = scmp.eq.s32.totalorder %s33, 0
      %p101 = por %p99, %p100
      %p102 = scmp.ne.s32.totalorder %s90, %s91
      %p103 = scmp.eq.s32.totalorder %s34, 1
      %p104 = por %p102, %p103
      %p106 = scmp.ne.s32.totalorder %s91, %s105
      %p107 = scmp.eq.s32.totalorder %s34, 0
      %p108 = por %p106, %p107
      %s110 = sadd.s32 %s109, 1
      %p113 = scmp.eq.s32.totalorder %s28, 1
      %p114 = scmp.ne.s32.totalorder %s109, %s111
      %p115 = scmp.eq.s32.totalorder %s28, 0
      %p116 = por %p114, %p115
      %p117 = scmp.ne.s32.totalorder %s109, %s111
      %p118 = scmp.eq.s32.totalorder %s33, 1
      %p119 = por %p117, %p118
      %p120 = scmp.ne.s32.totalorder %s111, %s112
      %p121 = scmp.eq.s32.totalorder %s33, 0
      %p122 = por %p120, %p121
      %p123 = scmp.ne.s32.totalorder %s111, %s112
      %p124 = scmp.eq.s32.totalorder %s34, 1
      %p125 = por %p123, %p124
      %p127 = scmp.ne.s32.totalorder %s112, %s126
      %p128 = scmp.eq.s32.totalorder %s34, 0
      %p129 = por %p127, %p128
      %s130 = ssub.s32 %s28, %s35
      %p131 = scmp.eq.s32.totalorder %s130, 0
      %s133 = sadd.s32 %s132, 1
      %s134 = scalar_select %p131, %s132, %s133
      %p137 = pneg %p131
      %p138 = scmp.eq.s32.totalorder %s28, 1
      %p139 = por %p137, %p138
      %p140 = scmp.ne.s32.totalorder %s132, %s135
      %p141 = scmp.eq.s32.totalorder %s28, 0
      %p142 = por %p140, %p141
      %p143 = scmp.ne.s32.totalorder %s132, %s135
      %p144 = scmp.eq.s32.totalorder %s33, 1
      %p145 = por %p143, %p144
      %p146 = scmp.ne.s32.totalorder %s135, %s136
      %p147 = scmp.eq.s32.totalorder %s33, 0
      %p148 = por %p146, %p147
      %p149 = scmp.ne.s32.totalorder %s135, %s136
      %p150 = scmp.eq.s32.totalorder %s34, 1
      %p151 = por %p149, %p150
      %p153 = scmp.ne.s32.totalorder %s136, %s152
      %p154 = scmp.eq.s32.totalorder %s34, 0
      %p155 = por %p153, %p154
      %s156 = ssub.s32 %s28, %s35
      %p157 = scmp.eq.s32.totalorder %s156, 0
      %s159 = sadd.s32 %s158, 1
      %s160 = scalar_select %p157, %s158, %s159
      %p163 = pneg %p157
      %p164 = scmp.eq.s32.totalorder %s28, 1
      %p165 = por %p163, %p164
      %p166 = scmp.ne.s32.totalorder %s158, %s161
      %p167 = scmp.eq.s32.totalorder %s28, 0
      %p168 = por %p166, %p167
      %p169 = scmp.ne.s32.totalorder %s158, %s161
      %p170 = scmp.eq.s32.totalorder %s33, 1
      %p171 = por %p169, %p170
      %p172 = scmp.ne.s32.totalorder %s161, %s162
      %p173 = scmp.eq.s32.totalorder %s33, 0
      %p174 = por %p172, %p173
      %p175 = scmp.ne.s32.totalorder %s161, %s162
      %p176 = scmp.eq.s32.totalorder %s34, 1
      %p177 = por %p175, %p176
      %p179 = scmp.ne.s32.totalorder %s162, %s178
      %p180 = scmp.eq.s32.totalorder %s34, 0
      %p181 = por %p179, %p180
      %s183 = sadd.s32 %s182, 1
      %p186 = scmp.eq.s32.totalorder %s28, 1
      %p187 = scmp.ne.s32.totalorder %s182, %s184
      %p188 = scmp.eq.s32.totalorder %s28, 0
      %p189 = por %p187, %p188
      %p190 = scmp.ne.s32.totalorder %s182, %s184
      %p191 = scmp.eq.s32.totalorder %s33, 1
      %p192 = por %p190, %p191
      %p193 = scmp.ne.s32.totalorder %s184, %s185
      %p194 = scmp.eq.s32.totalorder %s33, 0
      %p195 = por %p193, %p194
      %p196 = scmp.ne.s32.totalorder %s184, %s185
      %p197 = scmp.eq.s32.totalorder %s34, 1
      %p198 = por %p196, %p197
      %p200 = scmp.ne.s32.totalorder %s185, %s199
      %p201 = scmp.eq.s32.totalorder %s34, 0
      %p202 = por %p200, %p201
      %s204 = sadd.s32 %s203, 1
      %p207 = scmp.eq.s32.totalorder %s28, 1
      %p208 = scmp.ne.s32.totalorder %s203, %s205
      %p209 = scmp.eq.s32.totalorder %s28, 0
      %p210 = por %p208, %p209
      %p211 = scmp.ne.s32.totalorder %s203, %s205
      %p212 = scmp.eq.s32.totalorder %s33, 1
      %p213 = por %p211, %p212
      %p214 = scmp.ne.s32.totalorder %s205, %s206
      %p215 = scmp.eq.s32.totalorder %s33, 0
      %p216 = por %p214, %p215
      %p217 = scmp.ne.s32.totalorder %s205, %s206
      %p218 = scmp.eq.s32.totalorder %s34, 1
      %p219 = por %p217, %p218
      %p221 = scmp.ne.s32.totalorder %s206, %s220
      %p222 = scmp.eq.s32.totalorder %s34, 0
      %p223 = por %p221, %p222
      %s224 = ssub.s32 %s28, %s35
      %p225 = scmp.eq.s32.totalorder %s224, 0
      %s227 = sadd.s32 %s226, 1
      %s228 = scalar_select %p225, %s226, %s227
      %p231 = pneg %p225
      %p232 = scmp.eq.s32.totalorder %s28, 1
      %p233 = por %p231, %p232
      %p234 = scmp.ne.s32.totalorder %s226, %s229
      %p235 = scmp.eq.s32.totalorder %s28, 0
      %p236 = por %p234, %p235
      %p237 = scmp.ne.s32.totalorder %s226, %s229
      %p238 = scmp.eq.s32.totalorder %s33, 1
      %p239 = por %p237, %p238
      %p240 = scmp.ne.s32.totalorder %s229, %s230
      %p241 = scmp.eq.s32.totalorder %s33, 0
      %p242 = por %p240, %p241
      %p243 = scmp.ne.s32.totalorder %s229, %s230
      %p244 = scmp.eq.s32.totalorder %s34, 1
      %p245 = por %p243, %p244
      %p247 = scmp.ne.s32.totalorder %s230, %s246
      %p248 = scmp.eq.s32.totalorder %s34, 0
      %p249 = por %p247, %p248
      %s250 = ssub.s32 %s28, %s35
      %p251 = scmp.eq.s32.totalorder %s250, 0
      %s253 = sadd.s32 %s252, 1
      %s254 = scalar_select %p251, %s252, %s253
      %p257 = pneg %p251
      %p258 = scmp.eq.s32.totalorder %s28, 1
      %p259 = por %p257, %p258
      %p260 = scmp.ne.s32.totalorder %s252, %s255
      %p261 = scmp.eq.s32.totalorder %s28, 0
      %p262 = por %p260, %p261
      %p263 = scmp.ne.s32.totalorder %s252, %s255
      %p264 = scmp.eq.s32.totalorder %s33, 1
      %p265 = por %p263, %p264
      %p266 = scmp.ne.s32.totalorder %s255, %s256
      %p267 = scmp.eq.s32.totalorder %s33, 0
      %p268 = por %p266, %p267
      %p269 = scmp.ne.s32.totalorder %s255, %s256
      %p270 = scmp.eq.s32.totalorder %s34, 1
      %p271 = por %p269, %p270
      %p273 = scmp.ne.s32.totalorder %s256, %s272
      %p274 = scmp.eq.s32.totalorder %s34, 0
      %p275 = por %p273, %p274
      %s277 = sadd.s32 %s276, 1
      %p280 = scmp.eq.s32.totalorder %s28, 1
      %p281 = scmp.ne.s32.totalorder %s276, %s278
      %p282 = scmp.eq.s32.totalorder %s28, 0
      %p283 = por %p281, %p282
      %p284 = scmp.ne.s32.totalorder %s276, %s278
      %p285 = scmp.eq.s32.totalorder %s33, 1
      %p286 = por %p284, %p285
      %p287 = scmp.ne.s32.totalorder %s278, %s279
      %p288 = scmp.eq.s32.totalorder %s33, 0
      %p289 = por %p287, %p288
      %p290 = scmp.ne.s32.totalorder %s278, %s279
      %p291 = scmp.eq.s32.totalorder %s34, 1
      %p292 = por %p290, %p291
      %p294 = scmp.ne.s32.totalorder %s279, %s293
      %p295 = scmp.eq.s32.totalorder %s34, 0
      %p296 = por %p294, %p295
      %s298 = sadd.s32 %s297, 1
      %p301 = scmp.eq.s32.totalorder %s28, 1
      %p302 = scmp.ne.s32.totalorder %s297, %s299
      %p303 = scmp.eq.s32.totalorder %s28, 0
      %p304 = por %p302, %p303
      %p305 = scmp.ne.s32.totalorder %s297, %s299
      %p306 = scmp.eq.s32.totalorder %s33, 1
      %p307 = por %p305, %p306
      %p308 = scmp.ne.s32.totalorder %s299, %s300
      %p309 = scmp.eq.s32.totalorder %s33, 0
      %p310 = por %p308, %p309
      %p311 = scmp.ne.s32.totalorder %s299, %s300
      %p312 = scmp.eq.s32.totalorder %s34, 1
      %p313 = por %p311, %p312
      %p315 = scmp.ne.s32.totalorder %s300, %s314
      %p316 = scmp.eq.s32.totalorder %s34, 0
      %p317 = por %p315, %p316
      %s318 = ssub.s32 %s28, %s35
      %p319 = scmp.eq.s32.totalorder %s318, 0
      %s321 = sadd.s32 %s320, 1
      %s322 = scalar_select %p319, %s320, %s321
      %p325 = pneg %p319
      %p326 = scmp.eq.s32.totalorder %s28, 1
      %p327 = por %p325, %p326
      %p328 = scmp.ne.s32.totalorder %s320, %s323
      %p329 = scmp.eq.s32.totalorder %s28, 0
      %p330 = por %p328, %p329
      %p331 = scmp.ne.s32.totalorder %s320, %s323
      %p332 = scmp.eq.s32.totalorder %s33, 1
      %p333 = por %p331, %p332
      %p334 = scmp.ne.s32.totalorder %s323, %s324
      %p335 = scmp.eq.s32.totalorder %s33, 0
      %p336 = por %p334, %p335
      %p337 = scmp.ne.s32.totalorder %s323, %s324
      %p338 = scmp.eq.s32.totalorder %s34, 1
      %p339 = por %p337, %p338
      %p341 = scmp.ne.s32.totalorder %s324, %s340
      %p342 = scmp.eq.s32.totalorder %s34, 0
      %p343 = por %p341, %p342
      %s344 = ssub.s32 %s28, %s35
      %p345 = scmp.eq.s32.totalorder %s344, 0
      %s347 = sadd.s32 %s346, 1
      %s348 = scalar_select %p345, %s346, %s347
      %p351 = pneg %p345
      %p352 = scmp.eq.s32.totalorder %s28, 1
      %p353 = por %p351, %p352
      %p354 = scmp.ne.s32.totalorder %s346, %s349
      %p355 = scmp.eq.s32.totalorder %s28, 0
      %p356 = por %p354, %p355
      %p357 = scmp.ne.s32.totalorder %s346, %s349
      %p358 = scmp.eq.s32.totalorder %s33, 1
      %p359 = por %p357, %p358
      %p360 = scmp.ne.s32.totalorder %s349, %s350
      %p361 = scmp.eq.s32.totalorder %s33, 0
      %p362 = por %p360, %p361
      %p363 = scmp.ne.s32.totalorder %s349, %s350
      %p364 = scmp.eq.s32.totalorder %s34, 1
      %p365 = por %p363, %p364
      %p367 = scmp.ne.s32.totalorder %s350, %s366
      %p368 = scmp.eq.s32.totalorder %s34, 0
      %p369 = por %p367, %p368
      %s370 = ssub.s32 %s28, %s35
      %p371 = scmp.eq.s32.totalorder %s370, 0
      %s373 = sadd.s32 %s372, 1
      %s374 = scalar_select %p371, %s372, %s373
      %p377 = pneg %p371
      %p378 = scmp.eq.s32.totalorder %s28, 1
      %p379 = por %p377, %p378
      %p380 = scmp.ne.s32.totalorder %s372, %s375
      %p381 = scmp.eq.s32.totalorder %s28, 0
      %p382 = por %p380, %p381
      %p383 = scmp.ne.s32.totalorder %s372, %s375
      %p384 = scmp.eq.s32.totalorder %s33, 1
      %p385 = por %p383, %p384
      %p386 = scmp.ne.s32.totalorder %s375, %s376
      %p387 = scmp.eq.s32.totalorder %s33, 0
      %p388 = por %p386, %p387
      %p389 = scmp.ne.s32.totalorder %s375, %s376
      %p390 = scmp.eq.s32.totalorder %s34, 1
      %p391 = por %p389, %p390
      %p393 = scmp.ne.s32.totalorder %s376, %s392
      %p394 = scmp.eq.s32.totalorder %s34, 0
      %p395 = por %p393, %p394
      %p396 = scmp.le.s32.totalorder 1, %s28
      %p397 = scmp.lt.s32.totalorder %s28, 3
      %p398 = pnand %p396, %p397
      %p399 = pneg %p398
      // Predicated region
      $region9: #{tpu_custom_call.1} parent=5 // pred_check
        _
      $region10: #{tpu_custom_call.1} parent=5 // pred_check_branch
        %401 = sbr.rel (%p398) target = $region12
      $region11: #{tpu_custom_call.1} parent=5 // pred_region
        %s402 = ssub.s32 %s28, 1
        // Predicated region
        $region13: #{tpu_custom_call.1} parent=11 // pred_check
          %p403 = pneg %p101
        $region14: #{tpu_custom_call.1} parent=11 // pred_check_branch
          %405 = sbr.rel (%p403) target = $region16
        $region15: #{tpu_custom_call.1} parent=11 // pred_region
          %s407 = ssub.s32 128, 128
          %408 = vsyncadd [#allocation3], %s407
          %s410 = sshll.u32 [#allocation2], 4
          %s411 = int_to_ptr.vmem [resolvable:$true] %s410
          %413 = dma.hbm_to_vmem [thread:$0]  %s2, 128, %s411, [#allocation3]
        $region16: #{tpu_custom_call.1} parent=11 // pred_fallthru
          _
        // Predicated region
        $region17: #{tpu_custom_call.1} parent=11 // pred_check
          %p414 = pneg %p122
        $region18: #{tpu_custom_call.1} parent=11 // pred_check_branch
          %416 = sbr.rel (%p414) target = $region20
        $region19: #{tpu_custom_call.1} parent=11 // pred_region
          _
        $region20: #{tpu_custom_call.1} parent=11 // pred_fallthru
          _
        // Predicated region
        $region21: #{tpu_custom_call.1} parent=11 // pred_check
          %p417 = pneg %p195
        $region22: #{tpu_custom_call.1} parent=11 // pred_check_branch
          %419 = sbr.rel (%p417) target = $region24
        $region23: #{tpu_custom_call.1} parent=11 // pred_region
          _
        $region24: #{tpu_custom_call.1} parent=11 // pred_fallthru
          _
        // Predicated region
        $region25: #{tpu_custom_call.1} parent=11 // pred_check
          %p420 = pneg %p216
        $region26: #{tpu_custom_call.1} parent=11 // pred_check_branch
          %422 = sbr.rel (%p420) target = $region28
        $region27: #{tpu_custom_call.1} parent=11 // pred_region
          _
        $region28: #{tpu_custom_call.1} parent=11 // pred_fallthru
          _
        // Predicated region
        $region29: #{tpu_custom_call.1} parent=11 // pred_check
          %p423 = pneg %p289
        $region30: #{tpu_custom_call.1} parent=11 // pred_check_branch
          %425 = sbr.rel (%p423) target = $region32
        $region31: #{tpu_custom_call.1} parent=11 // pred_region
          _
        $region32: #{tpu_custom_call.1} parent=11 // pred_fallthru
          _
        // Predicated region
        $region33: #{tpu_custom_call.1} parent=11 // pred_check
          %p426 = pneg %p310
        $region34: #{tpu_custom_call.1} parent=11 // pred_check_branch
          %428 = sbr.rel (%p426) target = $region36
        $region35: #{tpu_custom_call.1} parent=11 // pred_region
          _
        $region36: #{tpu_custom_call.1} parent=11 // pred_fallthru
          _
      $region12: #{tpu_custom_call.1} parent=5 // pred_fallthru
        _
      %p429 = scmp.lt.s32.totalorder %s28, 2
      // Predicated region
      $region37: #{tpu_custom_call.1} parent=5 // pred_check
        %p430 = pneg %p429
      $region38: #{tpu_custom_call.1} parent=5 // pred_check_branch
        %432 = sbr.rel (%p430) target = $region40
      $region39: #{tpu_custom_call.1} parent=5 // pred_region
        // Predicated region
        $region41: #{tpu_custom_call.1} parent=39 // pred_check
          %p433 = pneg %p48
        $region42: #{tpu_custom_call.1} parent=39 // pred_check_branch
          %435 = sbr.rel (%p433) target = $region44
        $region43: #{tpu_custom_call.1} parent=39 // pred_region
          %p436 = scmp.lt.s32.totalorder %s28, 1
          %s437 = scalar_select %p436, %s28, 1
          %s438 = smul.addr %s437, 16
          %s439 = smul.addr %s438, 4
          %s440 = scalar_lea.vmem %s0, %s439
        $region44: #{tpu_custom_call.1} parent=39 // pred_fallthru
          _
        // Predicated region
        $region45: #{tpu_custom_call.1} parent=39 // pred_check
          %p441 = pneg %p74
        $region46: #{tpu_custom_call.1} parent=39 // pred_check_branch
          %443 = sbr.rel (%p441) target = $region48
        $region47: #{tpu_custom_call.1} parent=39 // pred_region
          %p444 = scmp.lt.s32.totalorder %s28, 1
          %s445 = scalar_select %p444, %s28, 1
          %s446 = smul.addr %s445, 4
          %s447 = smul.addr %s446, 2
          %s448 = scalar_lea.vmem %s1, %s447
        $region48: #{tpu_custom_call.1} parent=39 // pred_fallthru
          _
        // Predicated region
        $region49: #{tpu_custom_call.1} parent=39 // pred_check
          %p449 = pneg %p142
        $region50: #{tpu_custom_call.1} parent=39 // pred_check_branch
          %451 = sbr.rel (%p449) target = $region52
        $region51: #{tpu_custom_call.1} parent=39 // pred_region
          %p452 = scmp.lt.s32.totalorder %s28, 1
          %s453 = scalar_select %p452, %s28, 1
          %s454 = smul.addr %s453, 16
          %s455 = smul.addr %s454, 4
          %s456 = scalar_lea.vmem %s4, %s455
        $region52: #{tpu_custom_call.1} parent=39 // pred_fallthru
          _
        // Predicated region
        $region53: #{tpu_custom_call.1} parent=39 // pred_check
          %p457 = pneg %p168
        $region54: #{tpu_custom_call.1} parent=39 // pred_check_branch
          %459 = sbr.rel (%p457) target = $region56
        $region55: #{tpu_custom_call.1} parent=39 // pred_region
          %p460 = scmp.lt.s32.totalorder %s28, 1
          %s461 = scalar_select %p460, %s28, 1
          %s462 = smul.addr %s461, 2
          %s463 = smul.addr %s462, 2
          %s464 = scalar_lea.vmem %s5, %s463
        $region56: #{tpu_custom_call.1} parent=39 // pred_fallthru
          _
        // Predicated region
        $region57: #{tpu_custom_call.1} parent=39 // pred_check
          %p465 = pneg %p236
        $region58: #{tpu_custom_call.1} parent=39 // pred_check_branch
          %467 = sbr.rel (%p465) target = $region60
        $region59: #{tpu_custom_call.1} parent=39 // pred_region
          %p468 = scmp.lt.s32.totalorder %s28, 1
          %s469 = scalar_select %p468, %s28, 1
          %s470 = smul.addr %s469, 32
          %s471 = smul.addr %s470, 4
          %s472 = scalar_lea.vmem %s8, %s471
        $region60: #{tpu_custom_call.1} parent=39 // pred_fallthru
          _
        // Predicated region
        $region61: #{tpu_custom_call.1} parent=39 // pred_check
          %p473 = pneg %p262
        $region62: #{tpu_custom_call.1} parent=39 // pred_check_branch
          %475 = sbr.rel (%p473) target = $region64
        $region63: #{tpu_custom_call.1} parent=39 // pred_region
          %p476 = scmp.lt.s32.totalorder %s28, 1
          %s477 = scalar_select %p476, %s28, 1
          %s478 = smul.addr %s477, 2
          %s479 = smul.addr %s478, 2
          %s480 = scalar_lea.vmem %s9, %s479
        $region64: #{tpu_custom_call.1} parent=39 // pred_fallthru
          _
      $region40: #{tpu_custom_call.1} parent=5 // pred_fallthru
        _
      %p481 = scmp.le.s32.totalorder 1, %s28
      %p482 = scmp.lt.s32.totalorder %s28, 3
      %p483 = pnand %p481, %p482
      %p484 = pneg %p483
      // Predicated region
      $region65: #{tpu_custom_call.1} parent=5 // pred_check
        _
      $region66: #{tpu_custom_call.1} parent=5 // pred_check_branch
        %486 = sbr.rel (%p483) target = $region68
      $region67: #{tpu_custom_call.1} parent=5 // pred_region
        %s487 = ssub.s32 %s28, 1
        // Predicated region
        $region69: #{tpu_custom_call.1} parent=67 // pred_check
          %p488 = pneg %p101
        $region70: #{tpu_custom_call.1} parent=67 // pred_check_branch
          %490 = sbr.rel (%p488) target = $region72
        $region71: #{tpu_custom_call.1} parent=67 // pred_region
          %491 = dma.done [#allocation3], 128
        $region72: #{tpu_custom_call.1} parent=67 // pred_fallthru
          _
        %p492 = scmp.lt.s32.totalorder %s33, 1
        %s493 = scalar_select %p492, %s33, 1
        %s494 = smul.addr %s493, 16
        %s495 = smul.addr %s494, 4
        %s496 = scalar_lea.vmem %s0, %s495
        %p497 = pneg %p54
        %p498 = pneg %p51
        %p499 = scmp.lt.s32.totalorder %s33, 1
        %s500 = scalar_select %p499, %s33, 1
        %s501 = smul.addr %s500, 4
        %s502 = smul.addr %s501, 2
        %s503 = scalar_lea.vmem %s1, %s502
        %p504 = pneg %p80
        %p505 = pneg %p77
        %p506 = pneg %p101
        %p507 = pneg %p98
        %p508 = pneg %p122
        %p509 = pneg %p119
        %p510 = scmp.lt.s32.totalorder %s33, 1
        %s511 = scalar_select %p510, %s33, 1
        %s512 = smul.addr %s511, 16
        %s513 = smul.addr %s512, 4
        %s514 = scalar_lea.vmem %s4, %s513
        %p515 = pneg %p148
        %p516 = pneg %p145
        %p517 = scmp.lt.s32.totalorder %s33, 1
        %s518 = scalar_select %p517, %s33, 1
        %s519 = smul.addr %s518, 2
        %s520 = smul.addr %s519, 2
        %s521 = scalar_lea.vmem %s5, %s520
        %p522 = pneg %p174
        %p523 = pneg %p171
        %p524 = pneg %p195
        %p525 = pneg %p192
        %p526 = pneg %p216
        %p527 = pneg %p213
        %p528 = scmp.lt.s32.totalorder %s33, 1
        %s529 = scalar_select %p528, %s33, 1
        %s530 = smul.addr %s529, 32
        %s531 = smul.addr %s530, 4
        %s532 = scalar_lea.vmem %s8, %s531
        %p533 = pneg %p242
        %p534 = pneg %p239
        %p535 = scmp.lt.s32.totalorder %s33, 1
        %s536 = scalar_select %p535, %s33, 1
        %s537 = smul.addr %s536, 2
        %s538 = smul.addr %s537, 2
        %s539 = scalar_lea.vmem %s9, %s538
        %p540 = pneg %p268
        %p541 = pneg %p265
        %p542 = pneg %p289
        %p543 = pneg %p286
        %p544 = pneg %p310
        %p545 = pneg %p307
        %p546 = pneg %p336
        %p547 = pneg %p333
        %s548 = sand.u32 %s323, 1
        %s549 = scalar_lea.sflag [#allocation4], %s548
        %s550 = sand.u32 %s323, 1
        %s551 = smul.addr %s550, 16
        %s552 = scalar_lea.vmem [#allocation5], %s551
        %p553 = pneg %p362
        %p554 = pneg %p359
        %s555 = sand.u32 %s349, 1
        %s556 = scalar_lea.sflag [#allocation7], %s555
        %s557 = sand.u32 %s349, 1
        %s558 = smul.addr %s557, 16
        %s559 = scalar_lea.vmem [#allocation6], %s558
        %p560 = pneg %p388
        %p561 = pneg %p385
        %p562 = scmp.lt.s32.totalorder %s33, 1
        %s563 = scalar_select %p562, %s33, 1
        %s564 = smul.addr %s563, 4
        %s565 = smul.addr %s564, 8
        %s566 = scalar_lea.vmem %s14, %s565
        %p567 = scmp.lt.s32.totalorder %s33, 1
        %s568 = scalar_select %p567, %s33, 1
        %s569 = smul.addr %s568, 16
        %s570 = smul.addr %s569, 4
        %s571 = scalar_lea.vmem %s0, %s570
        %p572 = scmp.lt.s32.totalorder %s33, 1
        %s573 = scalar_select %p572, %s33, 1
        %s574 = smul.addr %s573, 4
        %s575 = smul.addr %s574, 2
        %s576 = scalar_lea.vmem %s1, %s575
        %p577 = scmp.lt.s32.totalorder %s33, 1
        %s578 = scalar_select %p577, %s33, 1
        %s579 = smul.addr %s578, 16
        %s580 = smul.addr %s579, 4
        %s581 = scalar_lea.vmem %s4, %s580
        %p582 = scmp.lt.s32.totalorder %s33, 1
        %s583 = scalar_select %p582, %s33, 1
        %s584 = smul.addr %s583, 2
        %s585 = smul.addr %s584, 2
        %s586 = scalar_lea.vmem %s5, %s585
        %p587 = scmp.lt.s32.totalorder %s33, 1
        %s588 = scalar_select %p587, %s33, 1
        %s589 = smul.addr %s588, 32
        %s590 = smul.addr %s589, 4
        %s591 = scalar_lea.vmem %s8, %s590
        %p592 = scmp.lt.s32.totalorder %s33, 1
        %s593 = scalar_select %p592, %s33, 1
        %s594 = smul.addr %s593, 2
        %s595 = smul.addr %s594, 2
        %s596 = scalar_lea.vmem %s9, %s595
        %p597 = scmp.lt.s32.totalorder %s33, 1
        %s598 = scalar_select %p597, %s33, 1
        %s599 = smul.addr %s598, 4
        %s600 = smul.addr %s599, 8
        %s601 = scalar_lea.vmem %s14, %s600
        %v602 = vld [vmem:[%s576] sm:$0xf]
        %v603 = vld [vmem:[%s576 + $0x4] sm:$0xf]
        %v604 = vunpack.c.l.bf16 %v602
        %v605 = vunpack.c.l.bf16 %v603
        %v608 = vcombine.high %v604, %v604
        %v609 = vcombine.high %v605, %v605
        %vm612 = vcmask 1043456
        %v613 = vsel %vm612, %v604, 0.0
        %v614 = vsel %vm612, %v605, 0.0
        %v615 = vadd.f32 %v613, %v614
        %v616 = vsel %vm612, %v608, 0.0
        %v617 = vsel %vm612, %v609, 0.0
        %v618 = vadd.f32 %v616, %v617
        %v619 = vsub.f32 %v615, 1.0
        %v620 = vsub.f32 %v618, 1.0
        %v621 = vmax.f32 %v619, 0.0
        %v622 = vmax.f32 %v620, 0.0
        %v623 = vadd.f32 %v621, 1.0
        %v624 = vadd.f32 %v622, 1.0
        %v625 = vrcp.pop %v623
        %v626 = vrcp.pop %v624
        %v629 = vcombine.low %v625, %v626
        %v631 = vmul.f32 %v604, %v629
        %v633 = vcombine.high %v631, %v631
        %v635 = vcombine.low %v631, %v631
        %v637 = vsel %vm612, %v631, %v635
        %v638 = vsel %vm612, %v633, %v631
        %v639 = vld [vmem:[%s571] sm:$0xff]
        %v640 = vld [vmem:[%s571 + $0x8] sm:$0xff]
        %v641 = vld [vmem:[%s571 + $0x10] sm:$0xff]
        %v642 = vld [vmem:[%s571 + $0x18] sm:$0xff]
        %v643 = vunpack.c.l.bf16 %v639
        %v644 = vunpack.c.h.bf16 %v639
        %v645 = vunpack.c.l.bf16 %v640
        %v646 = vunpack.c.h.bf16 %v640
        %v647 = vunpack.c.l.bf16 %v641
        %v648 = vunpack.c.h.bf16 %v641
        %v649 = vunpack.c.l.bf16 %v642
        %v650 = vunpack.c.h.bf16 %v642
        %v651 = vmul.f32 %v643, %v637
        %v652 = vmul.f32 %v644, %v638
        %v653 = vmul.f32 %v645, %v637
        %v654 = vmul.f32 %v646, %v638
        %v655 = vmul.f32 %v647, %v637
        %v656 = vmul.f32 %v648, %v638
        %v657 = vmul.f32 %v649, %v637
        %v658 = vmul.f32 %v650, %v638
        %v659 = vmul.f32 %v605, %v629
        %v661 = vcombine.high %v659, %v659
        %v663 = vcombine.low %v659, %v659
        %v665 = vsel %vm612, %v659, %v663
        %v666 = vsel %vm612, %v661, %v659
        %s667 = scalar_lea.vmem %s571, 32
        %v668 = vld [vmem:[%s667] sm:$0xff]
        %v669 = vld [vmem:[%s667 + $0x8] sm:$0xff]
        %v670 = vld [vmem:[%s667 + $0x10] sm:$0xff]
        %v671 = vld [vmem:[%s667 + $0x18] sm:$0xff]
        %v672 = vunpack.c.l.bf16 %v668
        %v673 = vunpack.c.h.bf16 %v668
        %v674 = vunpack.c.l.bf16 %v669
        %v675 = vunpack.c.h.bf16 %v669
        %v676 = vunpack.c.l.bf16 %v670
        %v677 = vunpack.c.h.bf16 %v670
        %v678 = vunpack.c.l.bf16 %v671
        %v679 = vunpack.c.h.bf16 %v671
        %v680 = vmul.f32 %v672, %v665
        %v681 = vmul.f32 %v673, %v666
        %v682 = vmul.f32 %v674, %v665
        %v683 = vmul.f32 %v675, %v666
        %v684 = vmul.f32 %v676, %v665
        %v685 = vmul.f32 %v677, %v666
        %v686 = vmul.f32 %v678, %v665
        %v687 = vmul.f32 %v679, %v666
        %v688 = vadd.f32 %v651, %v680
        %v689 = vadd.f32 %v652, %v681
        %v690 = vadd.f32 %v653, %v682
        %v691 = vadd.f32 %v654, %v683
        %v692 = vadd.f32 %v655, %v684
        %v693 = vadd.f32 %v656, %v685
        %v694 = vadd.f32 %v657, %v686
        %v695 = vadd.f32 %v658, %v687
        %v696 = vld [vmem:[#allocation2] sm:$0xff]
        %v697 = vld [vmem:[%s3] sm:$0xff]
        %699 = vset.pattern.permute.xlu0 0
        %700 = vperm.xlu0 %699, %v697
        %v701 = vpop.permute.xlu0 %700
        %vm703 = vcmask 261120
        %v705 = vsel %vm703, %v696, 0
        %707 = vmatprep.subr.mxu0 %v689
        %708 = vmatpush1.msra.mxu0 %v688
        %709 = vmatprep.subr.mxu0 %v691
        %710 = vmatpush1.msra.mxu0 %v690
        %711 = vmatprep.subr.mxu0 %v693
        %712 = vmatpush1.msra.mxu0 %v692
        %713 = vmatprep.subr.mxu0 %v695
        %714 = vmatpush1.msra.mxu0 %v694
        %715 = vmatprep.subr.mxu0 0.0
        %716 = vmatpush1.msra.mxu0 0.0
        %717 = vmatprep.subr.mxu0 0.0
        %718 = vmatpush1.msra.mxu0 0.0
        %719 = vmatprep.subr.mxu0 0.0
        %720 = vmatpush1.msra.mxu0 0.0
        %721 = vmatprep.subr.mxu0 0.0
        %722 = vmatpush1.msra.mxu0 0.0
        %723 = vmatprep.subr.mxu0 0.0
        %724 = vmatpush1.msra.mxu0 0.0
        %725 = vmatprep.subr.mxu0 0.0
        %726 = vmatpush1.msra.mxu0 0.0
        %727 = vmatprep.subr.mxu0 0.0
        %728 = vmatpush1.msra.mxu0 0.0
        %729 = vmatprep.subr.mxu0 0.0
        %730 = vmatpush1.msra.mxu0 0.0
        %731 = vmatprep.subr.mxu0 0.0
        %732 = vmatpush1.msra.mxu0 0.0
        %733 = vmatprep.subr.mxu0 0.0
        %734 = vmatpush1.msra.mxu0 0.0
        %735 = vmatprep.subr.mxu0 0.0
        %736 = vmatpush1.msra.mxu0 0.0
        %737 = vmatprep.subr.mxu0 0.0
        %738 = vmatpush1.msra.mxu0 0.0
        %739 = vmatprep.subr.mxu0 0.0
        %740 = vmatpush1.msra.mxu0 0.0
        %741 = vmatprep.subr.mxu0 0.0
        %742 = vmatpush1.msra.mxu0 0.0
        %743 = vmatprep.subr.mxu0 0.0
        %744 = vmatpush1.msra.mxu0 0.0
        %745 = vmatprep.subr.mxu0 0.0
        %746 = vmatpush1.msra.mxu0 0.0
        %747 = vmatprep.subr.mxu0 0.0
        %748 = vmatpush1.msra.mxu0 0.0
        %749 = vmatprep.subr.mxu0 0.0
        %750 = vmatpush1.msra.mxu0 0.0
        %751 = vmatprep.subr.mxu0 0.0
        %752 = vmatpush1.msra.mxu0 0.0
        %753 = vmatprep.subr.mxu0 0.0
        %754 = vmatpush1.msra.mxu0 0.0
        %755 = vmatprep.subr.mxu0 0.0
        %756 = vmatpush1.msra.mxu0 0.0
        %757 = vmatprep.subr.mxu0 0.0
        %758 = vmatpush1.msra.mxu0 0.0
        %759 = vmatprep.subr.mxu0 0.0
        %760 = vmatpush1.msra.mxu0 0.0
        %761 = vmatprep.subr.mxu0 0.0
        %762 = vmatpush1.msra.mxu0 0.0
        %763 = vmatprep.subr.mxu0 0.0
        %764 = vmatpush1.msra.mxu0 0.0
        %765 = vmatprep.subr.mxu0 0.0
        %766 = vmatpush1.msra.mxu0 0.0
        %767 = vmatprep.subr.mxu0 0.0
        %768 = vmatpush1.msra.mxu0 0.0
        %769 = vmatprep.subr.mxu0 0.0
        %770 = vmatpush1.msra.mxu0 0.0
        %771 = vmatprep.mubr.f32.mxu0 0.0
        %772 = vmatmul.mubr.f32.gmra.mrb[0].mxu0 %v705
        %v773 = vpop.f32.mrb[0].mxu0
        %v774 = vadd.f32 %v701, %v773
        %v775 = vpop.f32.mrb[0].mxu0
        %v776 = vadd.f32 %v701, %v775
        %777 = vdwg.mxu0
        %v778 = vxor.u32 %v774, 2147483648
        %v779 = vxor.u32 %v776, 2147483648
        %v780 = vmul.f32 %v778, 1.442695
        %v781 = vpow.pop %v780
        %v782 = vmul.f32 %v779, 1.442695
        %v783 = vpow.pop %v782
        %v784 = vadd.f32 %v781, 1.0
        %v785 = vadd.f32 %v783, 1.0
        %v786 = vrcp.pop %v784
        %v787 = vmul.f32 1.0, %v786
        %v788 = vrcp.pop %v785
        %v789 = vmul.f32 1.0, %v788
        %v790 = vmul.f32 %v774, %v787
        %v791 = vmul.f32 %v776, %v789
        %792 = vst [vmem:[%s552] sm:$0xff] %v790
        %793 = vst [vmem:[%s552 + $0x8] sm:$0xff] %v791
        %v794 = vld [vmem:[%s586] sm:$0x3]
        %v795 = vld [vmem:[%s586 + $0x2] sm:$0x3]
        %v796 = vunpack.c.l.bf16 %v794
        %v797 = vunpack.c.l.bf16 %v795
        %vm798 = vcmask 519168
        %v799 = vsel %vm798, %v796, 0.0
        %v800 = vsel %vm798, %v797, 0.0
        %v801 = vadd.f32 %v799, %v800
        %v802 = vsub.f32 %v801, 1.0
        %v803 = vmax.f32 %v802, 0.0
        %v804 = vadd.f32 %v803, 1.0
        %v805 = vrcp.pop %v804
        %v806 = vmul.f32 %v796, %v805
        %v808 = vcombine.low %v806, %v806
        %v810 = vsel %vm612, %v806, %v808
        %v811 = vld [vmem:[%s581] sm:$0xf]
        %v812 = vld [vmem:[%s581 + $0x4] sm:$0xf]
        %v813 = vld [vmem:[%s581 + $0x8] sm:$0xf]
        %v814 = vld [vmem:[%s581 + $0xc] sm:$0xf]
        %v815 = vld [vmem:[%s581 + $0x10] sm:$0xf]
        %v816 = vld [vmem:[%s581 + $0x14] sm:$0xf]
        %v817 = vld [vmem:[%s581 + $0x18] sm:$0xf]
        %v818 = vld [vmem:[%s581 + $0x1c] sm:$0xf]
        %v819 = vunpack.c.l.bf16 %v811
        %v820 = vunpack.c.l.bf16 %v812
        %v821 = vunpack.c.l.bf16 %v813
        %v822 = vunpack.c.l.bf16 %v814
        %v823 = vunpack.c.l.bf16 %v815
        %v824 = vunpack.c.l.bf16 %v816
        %v825 = vunpack.c.l.bf16 %v817
        %v826 = vunpack.c.l.bf16 %v818
        %v827 = vmul.f32 %v819, %v810
        %v828 = vmul.f32 %v820, %v810
        %v829 = vmul.f32 %v821, %v810
        %v830 = vmul.f32 %v822, %v810
        %v831 = vmul.f32 %v823, %v810
        %v832 = vmul.f32 %v824, %v810
        %v833 = vmul.f32 %v825, %v810
        %v834 = vmul.f32 %v826, %v810
        %v835 = vmul.f32 %v797, %v805
        %v837 = vcombine.low %v835, %v835
        %v839 = vsel %vm612, %v835, %v837
        %s840 = scalar_lea.vmem %s581, 32
        %v841 = vld [vmem:[%s840] sm:$0xf]
        %v842 = vld [vmem:[%s840 + $0x4] sm:$0xf]
        %v843 = vld [vmem:[%s840 + $0x8] sm:$0xf]
        %v844 = vld [vmem:[%s840 + $0xc] sm:$0xf]
        %v845 = vld [vmem:[%s840 + $0x10] sm:$0xf]
        %v846 = vld [vmem:[%s840 + $0x14] sm:$0xf]
        %v847 = vld [vmem:[%s840 + $0x18] sm:$0xf]
        %v848 = vld [vmem:[%s840 + $0x1c] sm:$0xf]
        %v849 = vunpack.c.l.bf16 %v841
        %v850 = vunpack.c.l.bf16 %v842
        %v851 = vunpack.c.l.bf16 %v843
        %v852 = vunpack.c.l.bf16 %v844
        %v853 = vunpack.c.l.bf16 %v845
        %v854 = vunpack.c.l.bf16 %v846
        %v855 = vunpack.c.l.bf16 %v847
        %v856 = vunpack.c.l.bf16 %v848
        %v857 = vmul.f32 %v849, %v839
        %v858 = vmul.f32 %v850, %v839
        %v859 = vmul.f32 %v851, %v839
        %v860 = vmul.f32 %v852, %v839
        %v861 = vmul.f32 %v853, %v839
        %v862 = vmul.f32 %v854, %v839
        %v863 = vmul.f32 %v855, %v839
        %v864 = vmul.f32 %v856, %v839
        %v865 = vadd.f32 %v827, %v857
        %v866 = vadd.f32 %v828, %v858
        %v867 = vadd.f32 %v829, %v859
        %v868 = vadd.f32 %v830, %v860
        %v869 = vadd.f32 %v831, %v861
        %v870 = vadd.f32 %v832, %v862
        %v871 = vadd.f32 %v833, %v863
        %v872 = vadd.f32 %v834, %v864
        %v873 = vld [vmem:[%s6] sm:$0xff]
        %v874 = vld [vmem:[%s6 + $0x8] sm:$0xff]
        %v875 = vld [vmem:[%s7] sm:$0xff]
        %v876 = vld [vmem:[%s7 + $0x8] sm:$0xff]
        %878 = vset.pattern.permute.xlu0 0
        %879 = vperm.xlu0 %878, %v875
        %v880 = vpop.permute.xlu0 %879
        %883 = vset.pattern.permute.xlu0 0
        %884 = vperm.xlu0 %883, %v876
        %v885 = vpop.permute.xlu0 %884
        %vm887 = vcmask 523264
        %v889 = vsel %vm887, %v873, 0
        %v892 = vsel %vm887, %v874, 0
        %894 = vmatprep.subr.mxu0 0.0
        %895 = vmatpush1.msra.mxu0 %v865
        %896 = vmatprep.subr.mxu0 0.0
        %897 = vmatpush1.msra.mxu0 %v866
        %898 = vmatprep.subr.mxu0 0.0
        %899 = vmatpush1.msra.mxu0 %v867
        %900 = vmatprep.subr.mxu0 0.0
        %901 = vmatpush1.msra.mxu0 %v868
        %902 = vmatprep.subr.mxu0 0.0
        %903 = vmatpush1.msra.mxu0 %v869
        %904 = vmatprep.subr.mxu0 0.0
        %905 = vmatpush1.msra.mxu0 %v870
        %906 = vmatprep.subr.mxu0 0.0
        %907 = vmatpush1.msra.mxu0 %v871
        %908 = vmatprep.subr.mxu0 0.0
        %909 = vmatpush1.msra.mxu0 %v872
        %910 = vmatprep.subr.mxu0 0.0
        %911 = vmatpush1.msra.mxu0 0.0
        %912 = vmatprep.subr.mxu0 0.0
        %913 = vmatpush1.msra.mxu0 0.0
        %914 = vmatprep.subr.mxu0 0.0
        %915 = vmatpush1.msra.mxu0 0.0
        %916 = vmatprep.subr.mxu0 0.0
        %917 = vmatpush1.msra.mxu0 0.0
        %918 = vmatprep.subr.mxu0 0.0
        %919 = vmatpush1.msra.mxu0 0.0
        %920 = vmatprep.subr.mxu0 0.0
        %921 = vmatpush1.msra.mxu0 0.0
        %922 = vmatprep.subr.mxu0 0.0
        %923 = vmatpush1.msra.mxu0 0.0
        %924 = vmatprep.subr.mxu0 0.0
        %925 = vmatpush1.msra.mxu0 0.0
        %926 = vmatprep.subr.mxu0 0.0
        %927 = vmatpush1.msra.mxu0 0.0
        %928 = vmatprep.subr.mxu0 0.0
        %929 = vmatpush1.msra.mxu0 0.0
        %930 = vmatprep.subr.mxu0 0.0
        %931 = vmatpush1.msra.mxu0 0.0
        %932 = vmatprep.subr.mxu0 0.0
        %933 = vmatpush1.msra.mxu0 0.0
        %934 = vmatprep.subr.mxu0 0.0
        %935 = vmatpush1.msra.mxu0 0.0
        %936 = vmatprep.subr.mxu0 0.0
        %937 = vmatpush1.msra.mxu0 0.0
        %938 = vmatprep.subr.mxu0 0.0
        %939 = vmatpush1.msra.mxu0 0.0
        %940 = vmatprep.subr.mxu0 0.0
        %941 = vmatpush1.msra.mxu0 0.0
        %942 = vmatprep.subr.mxu0 0.0
        %943 = vmatpush1.msra.mxu0 0.0
        %944 = vmatprep.subr.mxu0 0.0
        %945 = vmatpush1.msra.mxu0 0.0
        %946 = vmatprep.subr.mxu0 0.0
        %947 = vmatpush1.msra.mxu0 0.0
        %948 = vmatprep.subr.mxu0 0.0
        %949 = vmatpush1.msra.mxu0 0.0
        %950 = vmatprep.subr.mxu0 0.0
        %951 = vmatpush1.msra.mxu0 0.0
        %952 = vmatprep.subr.mxu0 0.0
        %953 = vmatpush1.msra.mxu0 0.0
        %954 = vmatprep.subr.mxu0 0.0
        %955 = vmatpush1.msra.mxu0 0.0
        %956 = vmatprep.subr.mxu0 0.0
        %957 = vmatpush1.msra.mxu0 0.0
        %958 = vmatprep.mubr.f32.mxu0 0.0
        %959 = vmatmul.mubr.f32.gmra.mrb[0].mxu0 %v889
        %v960 = vpop.f32.mrb[0].mxu0
        %v961 = vadd.f32 %v880, %v960
        %v962 = vpop.f32.mrb[0].mxu0
        %963 = vmatprep.mubr.f32.mxu0 0.0
        %964 = vmatmul.mubr.f32.gmra.mrb[0].mxu0 %v892
        %v965 = vpop.f32.mrb[0].mxu0
        %v966 = vadd.f32 %v885, %v965
        %v967 = vpop.f32.mrb[0].mxu0
        %968 = vdwg.mxu0
        %v969 = vxor.u32 %v961, 2147483648
        %v970 = vxor.u32 %v966, 2147483648
        %v971 = vmul.f32 %v969, 1.442695
        %v972 = vpow.pop %v971
        %v973 = vmul.f32 %v970, 1.442695
        %v974 = vpow.pop %v973
        %v975 = vadd.f32 %v972, 1.0
        %v976 = vadd.f32 %v974, 1.0
        %v977 = vrcp.pop %v975
        %v978 = vmul.f32 1.0, %v977
        %v979 = vrcp.pop %v976
        %v980 = vmul.f32 1.0, %v979
        %v981 = vmul.f32 %v961, %v978
        %v982 = vmul.f32 %v966, %v980
        %983 = vst.msk [vmem:[%s559] sm:$0xff] %vm887, %v981
        %984 = vst.msk [vmem:[%s559 + $0x8] sm:$0xff] %vm887, %v982
        %v985 = vld [vmem:[%s596] sm:$0x3]
        %v986 = vld [vmem:[%s596 + $0x2] sm:$0x3]
        %v987 = vunpack.c.l.bf16 %v985
        %v988 = vunpack.c.l.bf16 %v986
        %vm989 = vcmask 125952
        %v990 = vsel %vm989, %v987, 0.0
        %v991 = vsel %vm989, %v988, 0.0
        %v992 = vadd.f32 %v990, %v991
        %v993 = vsub.f32 %v992, 1.0
        %v994 = vmax.f32 %v993, 0.0
        %v995 = vadd.f32 %v994, 1.0
        %v996 = vrcp.pop %v995
        %v997 = vmul.f32 %v987, %v996
        %v999 = vcombine.low %v997, %v997
        %v1001 = vsel %vm612, %v997, %v999
        %v1002 = vld [vmem:[%s591] sm:$0xf]
        %v1003 = vld [vmem:[%s591 + $0x4] sm:$0xf]
        %v1004 = vld [vmem:[%s591 + $0x8] sm:$0xf]
        %v1005 = vld [vmem:[%s591 + $0xc] sm:$0xf]
        %v1006 = vld [vmem:[%s591 + $0x10] sm:$0xf]
        %v1007 = vld [vmem:[%s591 + $0x14] sm:$0xf]
        %v1008 = vld [vmem:[%s591 + $0x18] sm:$0xf]
        %v1009 = vld [vmem:[%s591 + $0x1c] sm:$0xf]
        %v1010 = vld [vmem:[%s591 + $0x20] sm:$0xf]
        %v1011 = vld [vmem:[%s591 + $0x24] sm:$0xf]
        %v1012 = vld [vmem:[%s591 + $0x28] sm:$0xf]
        %v1013 = vld [vmem:[%s591 + $0x2c] sm:$0xf]
        %v1014 = vld [vmem:[%s591 + $0x30] sm:$0xf]
        %v1015 = vld [vmem:[%s591 + $0x34] sm:$0xf]
        %v1016 = vld [vmem:[%s591 + $0x38] sm:$0xf]
        %v1017 = vld [vmem:[%s591 + $0x3c] sm:$0xf]
        %v1018 = vunpack.c.l.bf16 %v1002
        %v1019 = vunpack.c.l.bf16 %v1003
        %v1020 = vunpack.c.l.bf16 %v1004
        %v1021 = vunpack.c.l.bf16 %v1005
        %v1022 = vunpack.c.l.bf16 %v1006
        %v1023 = vunpack.c.l.bf16 %v1007
        %v1024 = vunpack.c.l.bf16 %v1008
        %v1025 = vunpack.c.l.bf16 %v1009
        %v1026 = vunpack.c.l.bf16 %v1010
        %v1027 = vunpack.c.l.bf16 %v1011
        %v1028 = vunpack.c.l.bf16 %v1012
        %v1029 = vunpack.c.l.bf16 %v1013
        %v1030 = vunpack.c.l.bf16 %v1014
        %v1031 = vunpack.c.l.bf16 %v1015
        %v1032 = vunpack.c.l.bf16 %v1016
        %v1033 = vunpack.c.l.bf16 %v1017
        %v1034 = vmul.f32 %v1018, %v1001
        %v1035 = vmul.f32 %v1019, %v1001
        %v1036 = vmul.f32 %v1020, %v1001
        %v1037 = vmul.f32 %v1021, %v1001
        %v1038 = vmul.f32 %v1022, %v1001
        %v1039 = vmul.f32 %v1023, %v1001
        %v1040 = vmul.f32 %v1024, %v1001
        %v1041 = vmul.f32 %v1025, %v1001
        %v1042 = vmul.f32 %v1026, %v1001
        %v1043 = vmul.f32 %v1027, %v1001
        %v1044 = vmul.f32 %v1028, %v1001
        %v1045 = vmul.f32 %v1029, %v1001
        %v1046 = vmul.f32 %v1030, %v1001
        %v1047 = vmul.f32 %v1031, %v1001
        %v1048 = vmul.f32 %v1032, %v1001
        %v1049 = vmul.f32 %v1033, %v1001
        %v1050 = vmul.f32 %v988, %v996
        %v1052 = vcombine.low %v1050, %v1050
        %v1054 = vsel %vm612, %v1050, %v1052
        %s1055 = scalar_lea.vmem %s591, 64
        %v1056 = vld [vmem:[%s1055] sm:$0xf]
        %v1057 = vld [vmem:[%s1055 + $0x4] sm:$0xf]
        %v1058 = vld [vmem:[%s1055 + $0x8] sm:$0xf]
        %v1059 = vld [vmem:[%s1055 + $0xc] sm:$0xf]
        %v1060 = vld [vmem:[%s1055 + $0x10] sm:$0xf]
        %v1061 = vld [vmem:[%s1055 + $0x14] sm:$0xf]
        %v1062 = vld [vmem:[%s1055 + $0x18] sm:$0xf]
        %v1063 = vld [vmem:[%s1055 + $0x1c] sm:$0xf]
        %v1064 = vld [vmem:[%s1055 + $0x20] sm:$0xf]
        %v1065 = vld [vmem:[%s1055 + $0x24] sm:$0xf]
        %v1066 = vld [vmem:[%s1055 + $0x28] sm:$0xf]
        %v1067 = vld [vmem:[%s1055 + $0x2c] sm:$0xf]
        %v1068 = vld [vmem:[%s1055 + $0x30] sm:$0xf]
        %v1069 = vld [vmem:[%s1055 + $0x34] sm:$0xf]
        %v1070 = vld [vmem:[%s1055 + $0x38] sm:$0xf]
        %v1071 = vld [vmem:[%s1055 + $0x3c] sm:$0xf]
        %v1072 = vunpack.c.l.bf16 %v1056
        %v1073 = vunpack.c.l.bf16 %v1057
        %v1074 = vunpack.c.l.bf16 %v1058
        %v1075 = vunpack.c.l.bf16 %v1059
        %v1076 = vunpack.c.l.bf16 %v1060
        %v1077 = vunpack.c.l.bf16 %v1061
        %v1078 = vunpack.c.l.bf16 %v1062
        %v1079 = vunpack.c.l.bf16 %v1063
        %v1080 = vunpack.c.l.bf16 %v1064
        %v1081 = vunpack.c.l.bf16 %v1065
        %v1082 = vunpack.c.l.bf16 %v1066
        %v1083 = vunpack.c.l.bf16 %v1067
        %v1084 = vunpack.c.l.bf16 %v1068
        %v1085 = vunpack.c.l.bf16 %v1069
        %v1086 = vunpack.c.l.bf16 %v1070
        %v1087 = vunpack.c.l.bf16 %v1071
        %v1088 = vmul.f32 %v1072, %v1054
        %v1089 = vmul.f32 %v1073, %v1054
        %v1090 = vmul.f32 %v1074, %v1054
        %v1091 = vmul.f32 %v1075, %v1054
        %v1092 = vmul.f32 %v1076, %v1054
        %v1093 = vmul.f32 %v1077, %v1054
        %v1094 = vmul.f32 %v1078, %v1054
        %v1095 = vmul.f32 %v1079, %v1054
        %v1096 = vmul.f32 %v1080, %v1054
        %v1097 = vmul.f32 %v1081, %v1054
        %v1098 = vmul.f32 %v1082, %v1054
        %v1099 = vmul.f32 %v1083, %v1054
        %v1100 = vmul.f32 %v1084, %v1054
        %v1101 = vmul.f32 %v1085, %v1054
        %v1102 = vmul.f32 %v1086, %v1054
        %v1103 = vmul.f32 %v1087, %v1054
        %v1104 = vadd.f32 %v1034, %v1088
        %v1105 = vadd.f32 %v1035, %v1089
        %v1106 = vadd.f32 %v1036, %v1090
        %v1107 = vadd.f32 %v1037, %v1091
        %v1108 = vadd.f32 %v1038, %v1092
        %v1109 = vadd.f32 %v1039, %v1093
        %v1110 = vadd.f32 %v1040, %v1094
        %v1111 = vadd.f32 %v1041, %v1095
        %v1112 = vadd.f32 %v1042, %v1096
        %v1113 = vadd.f32 %v1043, %v1097
        %v1114 = vadd.f32 %v1044, %v1098
        %v1115 = vadd.f32 %v1045, %v1099
        %v1116 = vadd.f32 %v1046, %v1100
        %v1117 = vadd.f32 %v1047, %v1101
        %v1118 = vadd.f32 %v1048, %v1102
        %v1119 = vadd.f32 %v1049, %v1103
        %v1120 = vld [vmem:[%s10] sm:$0xff]
        %v1121 = vld [vmem:[%s10 + $0x8] sm:$0xff]
        %v1122 = vld [vmem:[%s10 + $0x10] sm:$0xff]
        %v1123 = vld [vmem:[%s10 + $0x18] sm:$0xff]
        %v1124 = vld [vmem:[%s11] sm:$0xff]
        %v1125 = vld [vmem:[%s11 + $0x8] sm:$0xff]
        %v1126 = vld [vmem:[%s11 + $0x10] sm:$0xff]
        %v1127 = vld [vmem:[%s11 + $0x18] sm:$0xff]
        %1129 = vset.pattern.permute.xlu0 0
        %1130 = vperm.xlu0 %1129, %v1124
        %v1131 = vpop.permute.xlu0 %1130
        %1134 = vset.pattern.permute.xlu0 0
        %1135 = vperm.xlu0 %1134, %v1125
        %v1136 = vpop.permute.xlu0 %1135
        %1139 = vset.pattern.permute.xlu0 0
        %1140 = vperm.xlu0 %1139, %v1126
        %v1141 = vpop.permute.xlu0 %1140
        %1144 = vset.pattern.permute.xlu0 0
        %1145 = vperm.xlu0 %1144, %v1127
        %v1146 = vpop.permute.xlu0 %1145
        %1148 = vmatprep.subr.mxu0 0.0
        %1149 = vmatpush1.msra.mxu0 %v1104
        %1150 = vmatprep.subr.mxu0 0.0
        %1151 = vmatpush1.msra.mxu0 %v1105
        %1152 = vmatprep.subr.mxu0 0.0
        %1153 = vmatpush1.msra.mxu0 %v1106
        %1154 = vmatprep.subr.mxu0 0.0
        %1155 = vmatpush1.msra.mxu0 %v1107
        %1156 = vmatprep.subr.mxu0 0.0
        %1157 = vmatpush1.msra.mxu0 %v1108
        %1158 = vmatprep.subr.mxu0 0.0
        %1159 = vmatpush1.msra.mxu0 %v1109
        %1160 = vmatprep.subr.mxu0 0.0
        %1161 = vmatpush1.msra.mxu0 %v1110
        %1162 = vmatprep.subr.mxu0 0.0
        %1163 = vmatpush1.msra.mxu0 %v1111
        %1164 = vmatprep.subr.mxu0 0.0
        %1165 = vmatpush1.msra.mxu0 %v1112
        %1166 = vmatprep.subr.mxu0 0.0
        %1167 = vmatpush1.msra.mxu0 %v1113
        %1168 = vmatprep.subr.mxu0 0.0
        %1169 = vmatpush1.msra.mxu0 %v1114
        %1170 = vmatprep.subr.mxu0 0.0
        %1171 = vmatpush1.msra.mxu0 %v1115
        %1172 = vmatprep.subr.mxu0 0.0
        %1173 = vmatpush1.msra.mxu0 %v1116
        %1174 = vmatprep.subr.mxu0 0.0
        %1175 = vmatpush1.msra.mxu0 %v1117
        %1176 = vmatprep.subr.mxu0 0.0
        %1177 = vmatpush1.msra.mxu0 %v1118
        %1178 = vmatprep.subr.mxu0 0.0
        %1179 = vmatpush1.msra.mxu0 %v1119
        %1180 = vmatprep.subr.mxu0 0.0
        %1181 = vmatpush1.msra.mxu0 0.0
        %1182 = vmatprep.subr.mxu0 0.0
        %1183 = vmatpush1.msra.mxu0 0.0
        %1184 = vmatprep.subr.mxu0 0.0
        %1185 = vmatpush1.msra.mxu0 0.0
        %1186 = vmatprep.subr.mxu0 0.0
        %1187 = vmatpush1.msra.mxu0 0.0
        %1188 = vmatprep.subr.mxu0 0.0
        %1189 = vmatpush1.msra.mxu0 0.0
        %1190 = vmatprep.subr.mxu0 0.0
        %1191 = vmatpush1.msra.mxu0 0.0
        %1192 = vmatprep.subr.mxu0 0.0
        %1193 = vmatpush1.msra.mxu0 0.0
        %1194 = vmatprep.subr.mxu0 0.0
        %1195 = vmatpush1.msra.mxu0 0.0
        %1196 = vmatprep.subr.mxu0 0.0
        %1197 = vmatpush1.msra.mxu0 0.0
        %1198 = vmatprep.subr.mxu0 0.0
        %1199 = vmatpush1.msra.mxu0 0.0
        %1200 = vmatprep.subr.mxu0 0.0
        %1201 = vmatpush1.msra.mxu0 0.0
        %1202 = vmatprep.subr.mxu0 0.0
        %1203 = vmatpush1.msra.mxu0 0.0
        %1204 = vmatprep.subr.mxu0 0.0
        %1205 = vmatpush1.msra.mxu0 0.0
        %1206 = vmatprep.subr.mxu0 0.0
        %1207 = vmatpush1.msra.mxu0 0.0
        %1208 = vmatprep.subr.mxu0 0.0
        %1209 = vmatpush1.msra.mxu0 0.0
        %1210 = vmatprep.subr.mxu0 0.0
        %1211 = vmatpush1.msra.mxu0 0.0
        %1212 = vmatprep.mubr.f32.mxu0 0.0
        %1213 = vmatmul.mubr.f32.gmra.mrb[0].mxu0 %v1120
        %v1214 = vpop.f32.mrb[0].mxu0
        %v1215 = vadd.f32 %v1131, %v1214
        %v1216 = vpop.f32.mrb[0].mxu0
        %1217 = vmatprep.mubr.f32.mxu0 0.0
        %1218 = vmatmul.mubr.f32.gmra.mrb[0].mxu0 %v1121
        %v1219 = vpop.f32.mrb[0].mxu0
        %v1220 = vadd.f32 %v1136, %v1219
        %v1221 = vpop.f32.mrb[0].mxu0
        %1222 = vmatprep.mubr.f32.mxu0 0.0
        %1223 = vmatmul.mubr.f32.gmra.mrb[0].mxu0 %v1122
        %v1224 = vpop.f32.mrb[0].mxu0
        %v1225 = vadd.f32 %v1141, %v1224
        %v1226 = vpop.f32.mrb[0].mxu0
        %1227 = vmatprep.mubr.f32.mxu0 0.0
        %1228 = vmatmul.mubr.f32.gmra.mrb[0].mxu0 %v1123
        %v1229 = vpop.f32.mrb[0].mxu0
        %v1230 = vadd.f32 %v1146, %v1229
        %v1231 = vpop.f32.mrb[0].mxu0
        %1232 = vdwg.mxu0
        %v1233 = vxor.u32 %v1215, 2147483648
        %v1234 = vxor.u32 %v1220, 2147483648
        %v1235 = vxor.u32 %v1225, 2147483648
        %v1236 = vxor.u32 %v1230, 2147483648
        %v1237 = vmul.f32 %v1233, 1.442695
        %v1238 = vpow.pop %v1237
        %v1239 = vmul.f32 %v1234, 1.442695
        %v1240 = vpow.pop %v1239
        %v1241 = vmul.f32 %v1235, 1.442695
        %v1242 = vpow.pop %v1241
        %v1243 = vmul.f32 %v1236, 1.442695
        %v1244 = vpow.pop %v1243
        %v1245 = vadd.f32 %v1238, 1.0
        %v1246 = vadd.f32 %v1240, 1.0
        %v1247 = vadd.f32 %v1242, 1.0
        %v1248 = vadd.f32 %v1244, 1.0
        %v1249 = vrcp.pop %v1245
        %v1250 = vmul.f32 1.0, %v1249
        %v1251 = vrcp.pop %v1246
        %v1252 = vmul.f32 1.0, %v1251
        %v1253 = vrcp.pop %v1247
        %v1254 = vmul.f32 1.0, %v1253
        %v1255 = vrcp.pop %v1248
        %v1256 = vmul.f32 1.0, %v1255
        %v1257 = vmul.f32 %v1215, %v1250
        %v1258 = vmul.f32 %v1220, %v1252
        %v1259 = vmul.f32 %v1225, %v1254
        %v1260 = vmul.f32 %v1230, %v1256
        %vm1261 = vcmask 130048
        %1262 = vst.msk [vmem:[%s601] sm:$0xff] %vm1261, %v1257
        %1263 = vst.msk [vmem:[%s601 + $0x8] sm:$0xff] %vm1261, %v1258
        %1264 = vst.msk [vmem:[%s601 + $0x10] sm:$0xff] %vm1261, %v1259
        %1265 = vst.msk [vmem:[%s601 + $0x18] sm:$0xff] %vm1261, %v1260
        %s1266 = sand.u32 %s323, 1
        %s1267 = scalar_lea.sflag [#allocation4], %s1266
        %s1268 = sand.u32 %s323, 1
        %s1269 = smul.addr %s1268, 16
        %s1270 = scalar_lea.vmem [#allocation5], %s1269
        %s1271 = sand.u32 %s349, 1
        %s1272 = scalar_lea.sflag [#allocation7], %s1271
        %s1273 = sand.u32 %s349, 1
        %s1274 = smul.addr %s1273, 16
        %s1275 = scalar_lea.vmem [#allocation6], %s1274
        %p1276 = scmp.lt.s32.totalorder %s33, 1
        %s1277 = scalar_select %p1276, %s33, 1
        %s1278 = smul.addr %s1277, 4
        %s1279 = smul.addr %s1278, 8
        %s1280 = scalar_lea.vmem %s14, %s1279
        // Predicated region
        $region73: #{tpu_custom_call.1} parent=67 // pred_check
          %p1281 = pneg %p333
        $region74: #{tpu_custom_call.1} parent=67 // pred_check_branch
          %1283 = sbr.rel (%p1281) target = $region76
        $region75: #{tpu_custom_call.1} parent=67 // pred_region
          %s1285 = ssub.s32 256, 256
          %1286 = vsyncadd %s1267, %s1285
          %s1287 = smul.addr %s33, 2
          %s1288 = smul.addr %s1287, 128
          %s1289 = scalar_lea.hbm %s12, %s1288
          %s1291 = sshll.u32 %s1270, 4
          %s1292 = int_to_ptr.vmem [resolvable:$true] %s1291
          %1294 = dma.vmem_to_hbm [thread:$0]  %s1292, 256, %s1289, %s1267
        $region76: #{tpu_custom_call.1} parent=67 // pred_fallthru
          _
        // Predicated region
        $region77: #{tpu_custom_call.1} parent=67 // pred_check
          %p1295 = pneg %p359
        $region78: #{tpu_custom_call.1} parent=67 // pred_check_branch
          %1297 = sbr.rel (%p1295) target = $region80
        $region79: #{tpu_custom_call.1} parent=67 // pred_region
          %s1299 = ssub.s32 256, 256
          %1300 = vsyncadd %s1272, %s1299
          %s1301 = smul.addr %s33, 2
          %s1302 = smul.addr %s1301, 128
          %s1303 = scalar_lea.hbm %s13, %s1302
          %s1304 = sshll.u32 %s1275, 4
          %s1305 = int_to_ptr.vmem [resolvable:$true] %s1304
          %1310 = dma.vmem_to_hbm [thread:$0]  %s1305, 256, %s1303, %s1272, 128, 128, 8
        $region80: #{tpu_custom_call.1} parent=67 // pred_fallthru
          _
        // Predicated region
        $region81: #{tpu_custom_call.1} parent=67 // pred_check
          %p1311 = pneg %p385
        $region82: #{tpu_custom_call.1} parent=67 // pred_check_branch
          %1313 = sbr.rel (%p1311) target = $region84
        $region83: #{tpu_custom_call.1} parent=67 // pred_region
          _
        $region84: #{tpu_custom_call.1} parent=67 // pred_fallthru
          _
      $region68: #{tpu_custom_call.1} parent=5 // pred_fallthru
        _
      %p1314 = scmp.le.s32.totalorder 2, %s28
      // Predicated region
      $region85: #{tpu_custom_call.1} parent=5 // pred_check
        %p1315 = pneg %p1314
      $region86: #{tpu_custom_call.1} parent=5 // pred_check_branch
        %1317 = sbr.rel (%p1315) target = $region88
      $region87: #{tpu_custom_call.1} parent=5 // pred_region
        %s1318 = ssub.s32 %s28, 2
        // Predicated region
        $region89: #{tpu_custom_call.1} parent=87 // pred_check
          %p1319 = pneg %p339
        $region90: #{tpu_custom_call.1} parent=87 // pred_check_branch
          %1321 = sbr.rel (%p1319) target = $region92
        $region91: #{tpu_custom_call.1} parent=87 // pred_region
          %s1322 = sand.u32 %s324, 1
          %s1323 = scalar_lea.sflag [#allocation4], %s1322
          %s1324 = sand.u32 %s324, 1
          %s1325 = smul.addr %s1324, 16
          %s1326 = scalar_lea.vmem [#allocation5], %s1325
          %1327 = dma.done %s1323, 256
        $region92: #{tpu_custom_call.1} parent=87 // pred_fallthru
          _
        // Predicated region
        $region93: #{tpu_custom_call.1} parent=87 // pred_check
          %p1328 = pneg %p365
        $region94: #{tpu_custom_call.1} parent=87 // pred_check_branch
          %1330 = sbr.rel (%p1328) target = $region96
        $region95: #{tpu_custom_call.1} parent=87 // pred_region
          %s1331 = sand.u32 %s350, 1
          %s1332 = scalar_lea.sflag [#allocation7], %s1331
          %s1333 = sand.u32 %s350, 1
          %s1334 = smul.addr %s1333, 16
          %s1335 = scalar_lea.vmem [#allocation6], %s1334
          %1336 = dma.done %s1332, 256
        $region96: #{tpu_custom_call.1} parent=87 // pred_fallthru
          _
        // Predicated region
        $region97: #{tpu_custom_call.1} parent=87 // pred_check
          %p1337 = pneg %p391
        $region98: #{tpu_custom_call.1} parent=87 // pred_check_branch
          %1339 = sbr.rel (%p1337) target = $region100
        $region99: #{tpu_custom_call.1} parent=87 // pred_region
          %p1340 = scmp.lt.s32.totalorder %s34, 1
          %s1341 = scalar_select %p1340, %s34, 1
          %s1342 = smul.addr %s1341, 4
          %s1343 = smul.addr %s1342, 8
          %s1344 = scalar_lea.vmem %s14, %s1343
        $region100: #{tpu_custom_call.1} parent=87 // pred_fallthru
          _
      $region88: #{tpu_custom_call.1} parent=5 // pred_fallthru
        _
    $region6: #{tpu_custom_call.1} parent=1 // loop_footer
      %s32 = sadd.s32 1, %s28
    $region7: #{tpu_custom_call.1} parent=1 // loop_footer_branch
      %27 = sbr.rel target = $region3
    $region8: #{tpu_custom_call.1} parent=1 // loop_exit
      _
    %1345 = vsyncpa [#allocation3], 1
    %s1346 = scalar_lea.sflag [#allocation3], 1
    %1347 = vsyncpa %s1346, 1
    %1348 = vsyncpa [#allocation4], 1
    %s1349 = scalar_lea.sflag [#allocation4], 1
    %1350 = vsyncpa %s1349, 1
    %1351 = vsyncpa [#allocation7], 1
    %s1352 = scalar_lea.sflag [#allocation7], 1
    %1353 = vsyncpa %s1352, 1

</llo_original>
